<compile_context>
chip_gen: v6e
topology: v6e:2x2x1
jax: 0.10.0
libtpu: 0.0.40
codegen_flags: <defaults>
</compile_context>

<pallas_src>
import functools
import math

import jax
import jax.numpy as jnp
from jax import lax
from jax.experimental import pallas as pl
from jax.experimental.pallas import tpu as pltpu


# Row layout of the packed small-vector operand (f32, lanes padded to pack_w).
(_ROW_CLS, _ROW_B1, _ROW_BQKV1, _ROW_BO1, _ROW_BQ2,
 _ROW_BKV2, _ROW_BO2, _ROW_G, _ROW_BETA, _ROW_B2) = range(10)
_NUM_VEC_ROWS = 16  # sublane-aligned


def _round_up(x, m):
    return (x + m - 1) // m * m


# ----------------------------------------------------------------------------
# Kernel
# ----------------------------------------------------------------------------
def transmil_kernel(x_ref, w1_ref, wqkv1_ref, wo1_ref,
                    wq2_ref, wkv2_ref, wo2_ref, w2_ref, vec_ref,
                    out_ref, seq_ref, *, H):
    Bb, N, F = x_ref.shape
    D = w1_ref.shape[1]
    Cp = out_ref.shape[2]          # lane-padded logits width (>=128)
    S = N + 1
    S_pad = seq_ref.shape[1]
    hd = D // H
    f32 = jnp.float32
    bf16 = jnp.bfloat16

    # --- unpack the packed small vectors (all f32) ---
    vec = vec_ref[...]
    cls_tok = vec[_ROW_CLS:_ROW_CLS + 1, :D]            # (1, D)
    b1 = vec[_ROW_B1:_ROW_B1 + 1, :D]
    bqkv1 = vec[_ROW_BQKV1:_ROW_BQKV1 + 1, :3 * D]
    bo1 = vec[_ROW_BO1:_ROW_BO1 + 1, :D]
    bq2 = vec[_ROW_BQ2:_ROW_BQ2 + 1, :D]
    bkv2 = vec[_ROW_BKV2:_ROW_BKV2 + 1, :2 * D]
    bo2 = vec[_ROW_BO2:_ROW_BO2 + 1, :D]
    ln_g = vec[_ROW_G:_ROW_G + 1, :D]
    ln_b = vec[_ROW_BETA:_ROW_BETA + 1, :D]
    b2 = vec[_ROW_B2:_ROW_B2 + 1, :Cp]

    # --- fc1: batched rows fill the MXU M dimension ---
    x2d = x_ref[...].reshape(Bb * N, F)                               # bf16
    h2d = jnp.dot(x2d, w1_ref[...], preferred_element_type=f32) + b1  # (Bb*N, D)

    # --- assemble [instances ; cls ; 0-pad] in a bf16 sublane-aligned scratch ---
    seq_ref[:, 0:N, :] = h2d.reshape(Bb, N, D).astype(bf16)           # aligned bulk store
    seq_ref[:, N:S, :] = jnp.broadcast_to(
        cls_tok.astype(bf16)[None, :, :], (Bb, 1, D))
    if S_pad > S:                                                     # zero only the tail
        seq_ref[:, S:S_pad, :] = jnp.zeros((Bb, S_pad - S, D), bf16)
    seq = seq_ref[...]                                                # (Bb, S_pad, D) bf16

    # padded key positions must be masked before softmax
    key_valid = lax.broadcasted_iota(jnp.int32, (1, 1, S_pad), 2) < S

    def softmax_rows(s):
        s = jnp.where(key_valid, s, -1e30)
        m = jnp.max(s, axis=-1, keepdims=True)
        e = jnp.exp(s - m)
        denom = jnp.sum(e, axis=-1, keepdims=True)
        return e * pl.reciprocal(denom, approx=True)

    def mha_heads(q3, k3, v3):
        # q3:(Bb,Sq,D)  k3,v3:(Bb,S_pad,D)  -> concatenated head output (Bb,Sq,D)
        ohs = []
        for h in range(H):
            sl = slice(h * hd, (h + 1) * hd)
            s = jnp.einsum('bqd,bkd->bqk', q3[:, :, sl].astype(bf16),
                           k3[:, :, sl].astype(bf16),
                           preferred_element_type=f32)
            p = softmax_rows(s)
            ohs.append(jnp.einsum('bqk,bkd->bqd', p.astype(bf16),
                                  v3[:, :, sl].astype(bf16),
                                  preferred_element_type=f32))
        return jnp.concatenate(ohs, axis=-1)   # lane concat (heads live at h*hd)

    # --- MHA layer 1 (all query rows: they feed layer-2 K/V) ---
    qkv = (jnp.dot(seq.reshape(Bb * S_pad, D), wqkv1_ref[...],
                   preferred_element_type=f32) + bqkv1).reshape(Bb, S_pad, 3 * D)
    o1 = mha_heads(qkv[:, :, :D], qkv[:, :, D:2 * D], qkv[:, :, 2 * D:])
    seq1_2d = (jnp.dot(o1.reshape(Bb * S_pad, D).astype(bf16), wo1_ref[...],
                       preferred_element_type=f32) + bo1)             # single D-wide W_o
    seq1 = seq1_2d.reshape(Bb, S_pad, D)

    # --- MHA layer 2: only the class-token query is consumed downstream ---
    kv2 = (jnp.dot(seq1_2d.astype(bf16), wkv2_ref[...],
                   preferred_element_type=f32) + bkv2).reshape(Bb, S_pad, 2 * D)
    qc = jnp.dot(seq1[:, N, :].astype(bf16), wq2_ref[...],
                 preferred_element_type=f32) + bq2                    # (Bb, D)
    o2 = mha_heads(qc.reshape(Bb, 1, D), kv2[:, :, :D], kv2[:, :, D:])
    cls_out = jnp.dot(o2.reshape(Bb, D).astype(bf16), wo2_ref[...],
                      preferred_element_type=f32) + bo2               # (Bb, D)

    # --- LayerNorm (f32) + fc2 (lane-padded logits) ---
    mu = jnp.mean(cls_out, axis=-1, keepdims=True)
    var = jnp.mean((cls_out - mu) ** 2, axis=-1, keepdims=True)
    normed = (cls_out - mu) * lax.rsqrt(var + 1e-5) * ln_g + ln_b
    logits = jnp.dot(normed.astype(bf16), w2_ref[...],
                     preferred_element_type=f32) + b2                 # (Bb, Cp)
    out_ref[...] = logits.reshape(Bb, 1, Cp)


# ----------------------------------------------------------------------------
# Host-side param prep & wrapper
# ----------------------------------------------------------------------------
def _full_spec(shape):
    nd = len(shape)
    return pl.BlockSpec(shape, lambda i, _nd=nd: (0,) * _nd)


def _pick_batch_block(B, N, F, D, S_pad, *, mxu_m=256, vmem_budget=20 << 20):
    """Largest divisor of B such that (a) >=2 grid steps remain when B>=2
    (both v7x TensorCores get work), (b) the double-buffered bf16 x tile plus
    per-step activations stay inside a conservative scoped-VMEM budget, and
    (c) growth stops once Bb*N already fills the MXU M dimension."""
    best = 1
    for d in range(1, B + 1):
        if B % d:
            continue
        if B >= 2 and B // d < 2:
            break
        x_tile = 2 * d * N * F * 2                 # double-buffered bf16 input
        seq = d * S_pad * D * 2                    # bf16 sequence scratch
        qkv = d * S_pad * 3 * D * 4 * 2            # qkv / kv activations (f32)
        scores = d * S_pad * S_pad * 4 * 2         # per-head score + prob (f32)
        if x_tile + seq + qkv + scores > vmem_budget:
            break
        best = d
        if d * N >= mxu_m:
            break
    return best


def _prep_params(params, *, D, H, C, C_pad):
    (cls, w1, b1, wqkv1, bqkv1, wo1, bo1,
     wqkv2, bqkv2, wo2, bo2, g, beta, w2, b2) = params
    hd = D // H
    scale = 1.0 / math.sqrt(hd)
    f32 = jnp.float32
    bf16 = jnp.bfloat16

    # Fold 1/sqrt(hd) into the Q projection (layer 1 keeps fused QKV; layer 2
    # is split so the kernel projects queries for the class row only).
    wqkv1_s = jnp.concatenate([wqkv1[:, :D] * scale, wqkv1[:, D:]], axis=1)
    bqkv1_s = jnp.concatenate([bqkv1[:, :D] * scale, bqkv1[:, D:]], axis=1)
    wq2 = wqkv2[:, :D] * scale
    wkv2 = wqkv2[:, D:]
    bq2 = bqkv2[:, :D] * scale
    bkv2 = bqkv2[:, D:]

    # fc2 weight lane-padded so logits writeback is a lane-dense store.
    w2p = jnp.zeros((D, C_pad), f32).at[:, :C].set(w2)

    pack_w = _round_up(max(3 * D, C_pad, 128), 128)
    vec = jnp.zeros((_NUM_VEC_ROWS, pack_w), f32)
    vec = vec.at[_ROW_CLS, :D].set(cls.reshape(-1).astype(f32))
    vec = vec.at[_ROW_B1, :D].set(b1.reshape(-1))
    vec = vec.at[_ROW_BQKV1, :3 * D].set(bqkv1_s.reshape(-1))
    vec = vec.at[_ROW_BO1, :D].set(bo1.reshape(-1))
    vec = vec.at[_ROW_BQ2, :D].set(bq2.reshape(-1))
    vec = vec.at[_ROW_BKV2, :2 * D].set(bkv2.reshape(-1))
    vec = vec.at[_ROW_BO2, :D].set(bo2.reshape(-1))
    vec = vec.at[_ROW_G, :D].set(g.reshape(-1))
    vec = vec.at[_ROW_BETA, :D].set(beta.reshape(-1))
    vec = vec.at[_ROW_B2, :C].set(b2.reshape(-1))

    weights = tuple(w.astype(bf16) for w in
                    (w1, wqkv1_s, wo1, wq2, wkv2, wo2, w2p))
    return weights, vec


def transmil_forward(x, params, *, D, H, C, batch_block=None):
    B, N, F = x.shape
    assert D % H == 0
    S_pad = _round_up(N + 1, 8)
    C_pad = _round_up(max(C, 128), 128)
    Bb = (batch_block if batch_block is not None
          else _pick_batch_block(B, N, F, D, S_pad))
    assert B % Bb == 0, "batch block must divide batch"
    nb = B // Bb

    weights, vec = _prep_params(params, D=D, H=H, C=C, C_pad=C_pad)
    x_bf = x.astype(jnp.bfloat16)   # halve x HBM->VMEM bytes; MXU is bf16-native

    operands = (x_bf,) + weights + (vec,)
    in_specs = [pl.BlockSpec((Bb, N, F), lambda i: (i, 0, 0))]
    in_specs += [_full_spec(op.shape) for op in operands[1:]]

    # Explicit scoped-VMEM limit (conservative wrt v7x's 64 MiB physical).
    weight_bytes = sum(int(w.size) * w.dtype.itemsize for w in weights) \
        + int(vec.size) * 4
    act_bytes = (2 * Bb * N * F * 2 + Bb * S_pad * D * 2
                 + Bb * S_pad * 3 * D * 4 * 3 + Bb * S_pad * S_pad * 4 * 2)
    vmem_limit = int(min(max(2 * (weight_bytes + act_bytes), 32 << 20), 48 << 20))

    out = pl.pallas_call(
        functools.partial(transmil_kernel, H=H),
        out_shape=jax.ShapeDtypeStruct((B, 1, C_pad), jnp.float32),
        grid=(nb,),
        in_specs=in_specs,
        out_specs=pl.BlockSpec((Bb, 1, C_pad), lambda i: (i, 0, 0)),
        scratch_shapes=[pltpu.VMEM((Bb, S_pad, D), jnp.bfloat16)],
        compiler_params=pltpu.CompilerParams(
            dimension_semantics=("parallel",),
            vmem_limit_bytes=vmem_limit),
    )(*operands)
    return out[:, 0, :C]                                              # (B, C)


# ----------------------------------------------------------------------------
# Pure-JAX reference (PyTorch-structured; same bf16 matmul-input policy)
# ----------------------------------------------------------------------------
def transmil_reference(x, params, *, D, H):
    (cls, w1, b1, wqkv1, bqkv1, wo1, bo1,
     wqkv2, bqkv2, wo2, bo2, g, beta, w2, b2) = params
    B = x.shape[0]
    hd = D // H
    scale = 1.0 / math.sqrt(hd)
    bf = lambda t: t.astype(jnp.bfloat16)

    def mm(a, b):
        return jnp.dot(bf(a), bf(b), preferred_element_type=jnp.float32)

    def mha(xs, wqkv, bqkv, wo, bo):                   # xs: (B, S, D)
        qkv = mm(xs, wqkv) + bqkv
        q, k, v = qkv[..., :D], qkv[..., D:2 * D], qkv[..., 2 * D:]

        def split(t):
            return t.reshape(B, -1, H, hd).transpose(0, 2, 1, 3)   # (B,H,S,hd)

        qh, kh, vh = split(q) * scale, split(k), split(v)
        s = jnp.einsum('bhqd,bhkd->bhqk', bf(qh), bf(kh),
                       preferred_element_type=jnp.float32)
        p = jax.nn.softmax(s, axis=-1)
        o = jnp.einsum('bhqk,bhkd->bhqd', bf(p), bf(vh),
                       preferred_element_type=jnp.float32)
        o = o.transpose(0, 2, 1, 3).reshape(B, -1, D)
        return mm(o, wo) + bo

    h = mm(x, w1) + b1                                              # (B, N, D)
    seq = jnp.concatenate([jnp.broadcast_to(cls, (B, 1, D)), h], axis=1)
    seq = mha(seq, wqkv1, bqkv1, wo1, bo1)
    seq = mha(seq, wqkv2, bqkv2, wo2, bo2)
    c = seq[:, 0]                                                   # (B, D)
    mu = jnp.mean(c, axis=-1, keepdims=True)
    var = jnp.mean((c - mu) ** 2, axis=-1, keepdims=True)
    c = (c - mu) * jax.lax.rsqrt(var + 1e-5) * g + beta
    return mm(c, w2) + b2


# ----------------------------------------------------------------------------
# Deterministic parameter init (shapes from the module __init__)
# ----------------------------------------------------------------------------
def init_params(key, D, H, C, F=768):
    ks = jax.random.split(key, 16)
    s = 0.05
    cls = jax.random.uniform(ks[0], (1, 1, D), jnp.float32)
    w1 = jax.random.normal(ks[1], (F, D), jnp.float32) * s
    b1 = jax.random.normal(ks[2], (1, D), jnp.float32) * s
    wqkv1 = jax.random.normal(ks[3], (D, 3 * D), jnp.float32) * s
    bqkv1 = jax.random.normal(ks[4], (1, 3 * D), jnp.float32) * s
    wo1 = jax.random.normal(ks[5], (D, D), jnp.float32) * s
    bo1 = jax.random.normal(ks[6], (1, D), jnp.float32) * s
    wqkv2 = jax.random.normal(ks[7], (D, 3 * D), jnp.float32) * s
    bqkv2 = jax.random.normal(ks[8], (1, 3 * D), jnp.float32) * s
    wo2 = jax.random.normal(ks[9], (D, D), jnp.float32) * s
    bo2 = jax.random.normal(ks[10], (1, D), jnp.float32) * s
    g = jnp.ones((1, D), jnp.float32)
    beta = jnp.zeros((1, D), jnp.float32)
    w2 = jax.random.normal(ks[11], (D, C), jnp.float32) * s
    b2 = jax.random.normal(ks[12], (1, C), jnp.float32) * s
    return (cls, w1, b1, wqkv1, bqkv1, wo1, bo1,
            wqkv2, bqkv2, wo2, bo2, g, beta, w2, b2)


# ----------------------------------------------------------------------------
if __name__ == "__main__":
    B, N, F = 2, 8, 768          # batch, instances, input features (fc1 in = 768)
    D, H, C = 32, 4, 4           # new_num_features, n_heads, num_classes

    key = jax.random.PRNGKey(0)
    kx, kp = jax.random.split(key)
    x = jax.random.normal(kx, (B, N, F), jnp.float32)
    params = init_params(kp, D, H, C, F)

    out = transmil_forward(x, params, D=D, H=H, C=C)
    out = jax.block_until_ready(out)

    ref = transmil_reference(x, params, D=D, H=H)
    assert out.shape == (B, C)
    assert jnp.allclose(out, ref, atol=2e-2, rtol=2e-2), (
        f"max abs diff {jnp.max(jnp.abs(out - ref))}")

    print("KERNEL_OK")
</pallas_src>

<mosaic_0001>
module attributes {stable_mosaic.version = 11 : i64} {
  func.func @transmil_kernel(%arg0: i32, %arg1: memref<1x8x768xbf16, #tpu.memory_space<vmem>>, %arg2: memref<768x32xbf16, #tpu.memory_space<vmem>>, %arg3: memref<32x96xbf16, #tpu.memory_space<vmem>>, %arg4: memref<32x32xbf16, #tpu.memory_space<vmem>>, %arg5: memref<32x32xbf16, #tpu.memory_space<vmem>>, %arg6: memref<32x64xbf16, #tpu.memory_space<vmem>>, %arg7: memref<32x32xbf16, #tpu.memory_space<vmem>>, %arg8: memref<32x128xbf16, #tpu.memory_space<vmem>>, %arg9: memref<16x128xf32, #tpu.memory_space<vmem>>, %arg10: memref<1x1x128xf32, #tpu.memory_space<vmem>>, %arg11: memref<1x16x32xbf16, #tpu.memory_space<vmem>>) attributes {dimension_semantics = [#tpu.dimension_semantics<parallel>], iteration_bounds = array<i64: 2>, scalar_prefetch = 0 : i64, scratch_operands = 1 : i64, tpu.core_type = #tpu.core_type<tc>, window_params = [{transform_indices = @transform_0, window_bounds = array<i64: 1, 8, 768>}, {pipeline_mode = #tpu.pipeline_mode<synchronous>, transform_indices = @transform_1, window_bounds = array<i64: 768, 32>}, {pipeline_mode = #tpu.pipeline_mode<synchronous>, transform_indices = @transform_2, window_bounds = array<i64: 32, 96>}, {pipeline_mode = #tpu.pipeline_mode<synchronous>, transform_indices = @transform_3, window_bounds = array<i64: 32, 32>}, {pipeline_mode = #tpu.pipeline_mode<synchronous>, transform_indices = @transform_4, window_bounds = array<i64: 32, 32>}, {pipeline_mode = #tpu.pipeline_mode<synchronous>, transform_indices = @transform_5, window_bounds = array<i64: 32, 64>}, {pipeline_mode = #tpu.pipeline_mode<synchronous>, transform_indices = @transform_6, window_bounds = array<i64: 32, 32>}, {pipeline_mode = #tpu.pipeline_mode<synchronous>, transform_indices = @transform_7, window_bounds = array<i64: 32, 128>}, {pipeline_mode = #tpu.pipeline_mode<synchronous>, transform_indices = @transform_8, window_bounds = array<i64: 16, 128>}, {transform_indices = @transform_9, window_bounds = array<i64: 1, 1, 128>}]} {
    %c0 = arith.constant 0 : index
    %c0_0 = arith.constant 0 : index
    %0 = vector.load %arg9[%c0, %c0_0] : memref<16x128xf32, #tpu.memory_space<vmem>>, vector<16x128xf32>
    %1 = vector.extract_strided_slice %0 {offsets = [0, 0], sizes = [1, 32], strides = [1, 1]} : vector<16x128xf32> to vector<1x32xf32>
    %2 = vector.extract_strided_slice %0 {offsets = [1, 0], sizes = [1, 32], strides = [1, 1]} : vector<16x128xf32> to vector<1x32xf32>
    %3 = vector.extract_strided_slice %0 {offsets = [2, 0], sizes = [1, 96], strides = [1, 1]} : vector<16x128xf32> to vector<1x96xf32>
    %4 = vector.extract_strided_slice %0 {offsets = [3, 0], sizes = [1, 32], strides = [1, 1]} : vector<16x128xf32> to vector<1x32xf32>
    %5 = vector.extract_strided_slice %0 {offsets = [4, 0], sizes = [1, 32], strides = [1, 1]} : vector<16x128xf32> to vector<1x32xf32>
    %6 = vector.extract_strided_slice %0 {offsets = [5, 0], sizes = [1, 64], strides = [1, 1]} : vector<16x128xf32> to vector<1x64xf32>
    %7 = vector.extract_strided_slice %0 {offsets = [6, 0], sizes = [1, 32], strides = [1, 1]} : vector<16x128xf32> to vector<1x32xf32>
    %8 = vector.extract_strided_slice %0 {offsets = [7, 0], sizes = [1, 32], strides = [1, 1]} : vector<16x128xf32> to vector<1x32xf32>
    %9 = vector.extract_strided_slice %0 {offsets = [8, 0], sizes = [1, 32], strides = [1, 1]} : vector<16x128xf32> to vector<1x32xf32>
    %10 = vector.extract_strided_slice %0 {offsets = [9, 0], sizes = [1, 128], strides = [1, 1]} : vector<16x128xf32> to vector<1x128xf32>
    %c0_1 = arith.constant 0 : index
    %c0_2 = arith.constant 0 : index
    %c0_3 = arith.constant 0 : index
    %11 = vector.load %arg1[%c0_1, %c0_2, %c0_3] : memref<1x8x768xbf16, #tpu.memory_space<vmem>>, vector<1x8x768xbf16>
    %12 = vector.shape_cast %11 : vector<1x8x768xbf16> to vector<8x768xbf16>
    %c0_4 = arith.constant 0 : index
    %c0_5 = arith.constant 0 : index
    %13 = vector.load %arg2[%c0_4, %c0_5] : memref<768x32xbf16, #tpu.memory_space<vmem>>, vector<768x32xbf16>
    %cst = arith.constant dense<0.000000e+00> : vector<8x32xf32>
    %14 = tpu.matmul %12, %13, %cst {dimension_numbers = #tpu.dot_dimension_numbers<[1], [0], [0], [1], [0, 0, 1, 1], [], []>} : vector<8x768xbf16>, vector<768x32xbf16>, vector<8x32xf32> -> vector<8x32xf32>
    %15 = vector.broadcast %2 : vector<1x32xf32> to vector<8x32xf32>
    %16 = arith.addf %14, %15 : vector<8x32xf32>
    %17 = vector.shape_cast %16 : vector<8x32xf32> to vector<1x8x32xf32>
    %18 = arith.truncf %17 : vector<1x8x32xf32> to vector<1x8x32xbf16>
    %c0_6 = arith.constant 0 : index
    %c0_7 = arith.constant 0 : index
    %c0_8 = arith.constant 0 : index
    %19 = vector.load %arg11[%c0_6, %c0_7, %c0_8] : memref<1x16x32xbf16, #tpu.memory_space<vmem>>, vector<1x8x32xbf16>
    tpu.vector_store %arg11[%c0_6, %c0_7, %c0_8], %18 {strides = array<i32>} : memref<1x16x32xbf16, #tpu.memory_space<vmem>>, vector<1x8x32xbf16>,
    %20 = arith.truncf %1 : vector<1x32xf32> to vector<1x32xbf16>
    %21 = vector.shape_cast %20 : vector<1x32xbf16> to vector<1x1x32xbf16>
    %c0_9 = arith.constant 0 : index
    %c8 = arith.constant 8 : index
    %c0_10 = arith.constant 0 : index
    %22 = vector.load %arg11[%c0_9, %c8, %c0_10] : memref<1x16x32xbf16, #tpu.memory_space<vmem>>, vector<1x1x32xbf16>
    tpu.vector_store %arg11[%c0_9, %c8, %c0_10], %21 {strides = array<i32>} : memref<1x16x32xbf16, #tpu.memory_space<vmem>>, vector<1x1x32xbf16>,
    %cst_11 = arith.constant 0.000000e+00 : bf16
    %23 = vector.broadcast %cst_11 : bf16 to vector<1x7x32xbf16>
    %c0_12 = arith.constant 0 : index
    %c9 = arith.constant 9 : index
    %c0_13 = arith.constant 0 : index
    %24 = vector.load %arg11[%c0_12, %c9, %c0_13] : memref<1x16x32xbf16, #tpu.memory_space<vmem>>, vector<1x7x32xbf16>
    tpu.vector_store %arg11[%c0_12, %c9, %c0_13], %23 {strides = array<i32>} : memref<1x16x32xbf16, #tpu.memory_space<vmem>>, vector<1x7x32xbf16>,
    %c0_14 = arith.constant 0 : index
    %c0_15 = arith.constant 0 : index
    %c0_16 = arith.constant 0 : index
    %25 = vector.load %arg11[%c0_14, %c0_15, %c0_16] : memref<1x16x32xbf16, #tpu.memory_space<vmem>>, vector<1x16x32xbf16>
    %26 = tpu.iota {dimensions = array<i32: 2>} : vector<1x1x16xi32>
    %c9_i32 = arith.constant 9 : i32
    %27 = vector.broadcast %c9_i32 : i32 to vector<1x1x16xi32>
    %28 = arith.cmpi slt, %26, %27 : vector<1x1x16xi32>
    %29 = vector.shape_cast %25 : vector<1x16x32xbf16> to vector<16x32xbf16>
    %c0_17 = arith.constant 0 : index
    %c0_18 = arith.constant 0 : index
    %30 = vector.load %arg3[%c0_17, %c0_18] : memref<32x96xbf16, #tpu.memory_space<vmem>>, vector<32x96xbf16>
    %cst_19 = arith.constant dense<0.000000e+00> : vector<16x96xf32>
    %31 = tpu.matmul %29, %30, %cst_19 {dimension_numbers = #tpu.dot_dimension_numbers<[1], [0], [0], [1], [0, 0, 1, 1], [], []>} : vector<16x32xbf16>, vector<32x96xbf16>, vector<16x96xf32> -> vector<16x96xf32>
    %32 = vector.broadcast %3 : vector<1x96xf32> to vector<16x96xf32>
    %33 = arith.addf %31, %32 : vector<16x96xf32>
    %34 = vector.shape_cast %33 : vector<16x96xf32> to vector<1x16x96xf32>
    %35 = vector.extract_strided_slice %34 {offsets = [0, 0, 0], sizes = [1, 16, 32], strides = [1, 1, 1]} : vector<1x16x96xf32> to vector<1x16x32xf32>
    %36 = vector.extract_strided_slice %34 {offsets = [0, 0, 32], sizes = [1, 16, 32], strides = [1, 1, 1]} : vector<1x16x96xf32> to vector<1x16x32xf32>
    %37 = vector.extract_strided_slice %34 {offsets = [0, 0, 64], sizes = [1, 16, 32], strides = [1, 1, 1]} : vector<1x16x96xf32> to vector<1x16x32xf32>
    %38 = vector.extract_strided_slice %35 {offsets = [0, 0, 0], sizes = [1, 16, 8], strides = [1, 1, 1]} : vector<1x16x32xf32> to vector<1x16x8xf32>
    %39 = arith.truncf %38 : vector<1x16x8xf32> to vector<1x16x8xbf16>
    %40 = vector.extract_strided_slice %36 {offsets = [0, 0, 0], sizes = [1, 16, 8], strides = [1, 1, 1]} : vector<1x16x32xf32> to vector<1x16x8xf32>
    %41 = arith.truncf %40 : vector<1x16x8xf32> to vector<1x16x8xbf16>
    "tpu.trace_start"() <{level = 10 : i32, message = "bqd,bkd->bqk"}> : () -> ()
    %cst_20 = arith.constant dense<0.000000e+00> : vector<1x16x16xf32>
    %42 = tpu.matmul %39, %41, %cst_20 {dimension_numbers = #tpu.dot_dimension_numbers<[2], [2], [1], [1], [0, 0, 0, 1, 1, 1], [0], [0]>} : vector<1x16x8xbf16>, vector<1x16x8xbf16>, vector<1x16x16xf32> -> vector<1x16x16xf32>
    %cst_21 = arith.constant -1.000000e+30 : f32
    "tpu.trace_stop"() : () -> ()
    %43 = vector.shape_cast %28 : vector<1x1x16xi1> to vector<1x1x16xi1>
    %44 = vector.broadcast %43 : vector<1x1x16xi1> to vector<1x16x16xi1>
    %45 = vector.broadcast %cst_21 : f32 to vector<1x16x16xf32>
    %46 = arith.select %44, %42, %45 : vector<1x16x16xi1>, vector<1x16x16xf32>
    %cst_22 = arith.constant dense<0xFF800000> : vector<1x16xf32>
    %47 = vector.multi_reduction <maximumf>, %46, %cst_22 [2] : vector<1x16x16xf32> to vector<1x16xf32>
    %48 = vector.shape_cast %47 : vector<1x16xf32> to vector<1x16x1xf32>
    %49 = vector.broadcast %48 : vector<1x16x1xf32> to vector<1x16x16xf32>
    %50 = arith.subf %46, %49 : vector<1x16x16xf32>
    %51 = math.exp %50 : vector<1x16x16xf32>
    %cst_23 = arith.constant dense<0.000000e+00> : vector<1x16xf32>
    %52 = vector.multi_reduction <add>, %51, %cst_23 [2] : vector<1x16x16xf32> to vector<1x16xf32>
    %53 = vector.shape_cast %52 : vector<1x16xf32> to vector<1x16x1xf32>
    %54 = tpu.reciprocal %53 {approx = true} : vector<1x16x1xf32> -> vector<1x16x1xf32>
    %55 = vector.broadcast %54 : vector<1x16x1xf32> to vector<1x16x16xf32>
    %56 = arith.mulf %51, %55 : vector<1x16x16xf32>
    %57 = arith.truncf %56 : vector<1x16x16xf32> to vector<1x16x16xbf16>
    %58 = vector.extract_strided_slice %37 {offsets = [0, 0, 0], sizes = [1, 16, 8], strides = [1, 1, 1]} : vector<1x16x32xf32> to vector<1x16x8xf32>
    %59 = arith.truncf %58 : vector<1x16x8xf32> to vector<1x16x8xbf16>
    "tpu.trace_start"() <{level = 10 : i32, message = "bqk,bkd->bqd"}> : () -> ()
    %cst_24 = arith.constant dense<0.000000e+00> : vector<1x16x8xf32>
    %60 = tpu.matmul %57, %59, %cst_24 {dimension_numbers = #tpu.dot_dimension_numbers<[2], [1], [1], [2], [0, 0, 0, 1, 1, 2], [0], [0]>} : vector<1x16x16xbf16>, vector<1x16x8xbf16>, vector<1x16x8xf32> -> vector<1x16x8xf32>
    "tpu.trace_stop"() : () -> ()
    %61 = vector.extract_strided_slice %35 {offsets = [0, 0, 8], sizes = [1, 16, 8], strides = [1, 1, 1]} : vector<1x16x32xf32> to vector<1x16x8xf32>
    %62 = arith.truncf %61 : vector<1x16x8xf32> to vector<1x16x8xbf16>
    %63 = vector.extract_strided_slice %36 {offsets = [0, 0, 8], sizes = [1, 16, 8], strides = [1, 1, 1]} : vector<1x16x32xf32> to vector<1x16x8xf32>
    %64 = arith.truncf %63 : vector<1x16x8xf32> to vector<1x16x8xbf16>
    "tpu.trace_start"() <{level = 10 : i32, message = "bqd,bkd->bqk"}> : () -> ()
    %cst_25 = arith.constant dense<0.000000e+00> : vector<1x16x16xf32>
    %65 = tpu.matmul %62, %64, %cst_25 {dimension_numbers = #tpu.dot_dimension_numbers<[2], [2], [1], [1], [0, 0, 0, 1, 1, 1], [0], [0]>} : vector<1x16x8xbf16>, vector<1x16x8xbf16>, vector<1x16x16xf32> -> vector<1x16x16xf32>
    %cst_26 = arith.constant -1.000000e+30 : f32
    "tpu.trace_stop"() : () -> ()
    %66 = vector.shape_cast %28 : vector<1x1x16xi1> to vector<1x1x16xi1>
    %67 = vector.broadcast %66 : vector<1x1x16xi1> to vector<1x16x16xi1>
    %68 = vector.broadcast %cst_26 : f32 to vector<1x16x16xf32>
    %69 = arith.select %67, %65, %68 : vector<1x16x16xi1>, vector<1x16x16xf32>
    %cst_27 = arith.constant dense<0xFF800000> : vector<1x16xf32>
    %70 = vector.multi_reduction <maximumf>, %69, %cst_27 [2] : vector<1x16x16xf32> to vector<1x16xf32>
    %71 = vector.shape_cast %70 : vector<1x16xf32> to vector<1x16x1xf32>
    %72 = vector.broadcast %71 : vector<1x16x1xf32> to vector<1x16x16xf32>
    %73 = arith.subf %69, %72 : vector<1x16x16xf32>
    %74 = math.exp %73 : vector<1x16x16xf32>
    %cst_28 = arith.constant dense<0.000000e+00> : vector<1x16xf32>
    %75 = vector.multi_reduction <add>, %74, %cst_28 [2] : vector<1x16x16xf32> to vector<1x16xf32>
    %76 = vector.shape_cast %75 : vector<1x16xf32> to vector<1x16x1xf32>
    %77 = tpu.reciprocal %76 {approx = true} : vector<1x16x1xf32> -> vector<1x16x1xf32>
    %78 = vector.broadcast %77 : vector<1x16x1xf32> to vector<1x16x16xf32>
    %79 = arith.mulf %74, %78 : vector<1x16x16xf32>
    %80 = arith.truncf %79 : vector<1x16x16xf32> to vector<1x16x16xbf16>
    %81 = vector.extract_strided_slice %37 {offsets = [0, 0, 8], sizes = [1, 16, 8], strides = [1, 1, 1]} : vector<1x16x32xf32> to vector<1x16x8xf32>
    %82 = arith.truncf %81 : vector<1x16x8xf32> to vector<1x16x8xbf16>
    "tpu.trace_start"() <{level = 10 : i32, message = "bqk,bkd->bqd"}> : () -> ()
    %cst_29 = arith.constant dense<0.000000e+00> : vector<1x16x8xf32>
    %83 = tpu.matmul %80, %82, %cst_29 {dimension_numbers = #tpu.dot_dimension_numbers<[2], [1], [1], [2], [0, 0, 0, 1, 1, 2], [0], [0]>} : vector<1x16x16xbf16>, vector<1x16x8xbf16>, vector<1x16x8xf32> -> vector<1x16x8xf32>
    "tpu.trace_stop"() : () -> ()
    %84 = vector.extract_strided_slice %35 {offsets = [0, 0, 16], sizes = [1, 16, 8], strides = [1, 1, 1]} : vector<1x16x32xf32> to vector<1x16x8xf32>
    %85 = arith.truncf %84 : vector<1x16x8xf32> to vector<1x16x8xbf16>
    %86 = vector.extract_strided_slice %36 {offsets = [0, 0, 16], sizes = [1, 16, 8], strides = [1, 1, 1]} : vector<1x16x32xf32> to vector<1x16x8xf32>
    %87 = arith.truncf %86 : vector<1x16x8xf32> to vector<1x16x8xbf16>
    "tpu.trace_start"() <{level = 10 : i32, message = "bqd,bkd->bqk"}> : () -> ()
    %cst_30 = arith.constant dense<0.000000e+00> : vector<1x16x16xf32>
    %88 = tpu.matmul %85, %87, %cst_30 {dimension_numbers = #tpu.dot_dimension_numbers<[2], [2], [1], [1], [0, 0, 0, 1, 1, 1], [0], [0]>} : vector<1x16x8xbf16>, vector<1x16x8xbf16>, vector<1x16x16xf32> -> vector<1x16x16xf32>
    %cst_31 = arith.constant -1.000000e+30 : f32
    "tpu.trace_stop"() : () -> ()
    %89 = vector.shape_cast %28 : vector<1x1x16xi1> to vector<1x1x16xi1>
    %90 = vector.broadcast %89 : vector<1x1x16xi1> to vector<1x16x16xi1>
    %91 = vector.broadcast %cst_31 : f32 to vector<1x16x16xf32>
    %92 = arith.select %90, %88, %91 : vector<1x16x16xi1>, vector<1x16x16xf32>
    %cst_32 = arith.constant dense<0xFF800000> : vector<1x16xf32>
    %93 = vector.multi_reduction <maximumf>, %92, %cst_32 [2] : vector<1x16x16xf32> to vector<1x16xf32>
    %94 = vector.shape_cast %93 : vector<1x16xf32> to vector<1x16x1xf32>
    %95 = vector.broadcast %94 : vector<1x16x1xf32> to vector<1x16x16xf32>
    %96 = arith.subf %92, %95 : vector<1x16x16xf32>
    %97 = math.exp %96 : vector<1x16x16xf32>
    %cst_33 = arith.constant dense<0.000000e+00> : vector<1x16xf32>
    %98 = vector.multi_reduction <add>, %97, %cst_33 [2] : vector<1x16x16xf32> to vector<1x16xf32>
    %99 = vector.shape_cast %98 : vector<1x16xf32> to vector<1x16x1xf32>
    %100 = tpu.reciprocal %99 {approx = true} : vector<1x16x1xf32> -> vector<1x16x1xf32>
    %101 = vector.broadcast %100 : vector<1x16x1xf32> to vector<1x16x16xf32>
    %102 = arith.mulf %97, %101 : vector<1x16x16xf32>
    %103 = arith.truncf %102 : vector<1x16x16xf32> to vector<1x16x16xbf16>
    %104 = vector.extract_strided_slice %37 {offsets = [0, 0, 16], sizes = [1, 16, 8], strides = [1, 1, 1]} : vector<1x16x32xf32> to vector<1x16x8xf32>
    %105 = arith.truncf %104 : vector<1x16x8xf32> to vector<1x16x8xbf16>
    "tpu.trace_start"() <{level = 10 : i32, message = "bqk,bkd->bqd"}> : () -> ()
    %cst_34 = arith.constant dense<0.000000e+00> : vector<1x16x8xf32>
    %106 = tpu.matmul %103, %105, %cst_34 {dimension_numbers = #tpu.dot_dimension_numbers<[2], [1], [1], [2], [0, 0, 0, 1, 1, 2], [0], [0]>} : vector<1x16x16xbf16>, vector<1x16x8xbf16>, vector<1x16x8xf32> -> vector<1x16x8xf32>
    "tpu.trace_stop"() : () -> ()
    %107 = vector.extract_strided_slice %35 {offsets = [0, 0, 24], sizes = [1, 16, 8], strides = [1, 1, 1]} : vector<1x16x32xf32> to vector<1x16x8xf32>
    %108 = arith.truncf %107 : vector<1x16x8xf32> to vector<1x16x8xbf16>
    %109 = vector.extract_strided_slice %36 {offsets = [0, 0, 24], sizes = [1, 16, 8], strides = [1, 1, 1]} : vector<1x16x32xf32> to vector<1x16x8xf32>
    %110 = arith.truncf %109 : vector<1x16x8xf32> to vector<1x16x8xbf16>
    "tpu.trace_start"() <{level = 10 : i32, message = "bqd,bkd->bqk"}> : () -> ()
    %cst_35 = arith.constant dense<0.000000e+00> : vector<1x16x16xf32>
    %111 = tpu.matmul %108, %110, %cst_35 {dimension_numbers = #tpu.dot_dimension_numbers<[2], [2], [1], [1], [0, 0, 0, 1, 1, 1], [0], [0]>} : vector<1x16x8xbf16>, vector<1x16x8xbf16>, vector<1x16x16xf32> -> vector<1x16x16xf32>
    %cst_36 = arith.constant -1.000000e+30 : f32
    "tpu.trace_stop"() : () -> ()
    %112 = vector.shape_cast %28 : vector<1x1x16xi1> to vector<1x1x16xi1>
    %113 = vector.broadcast %112 : vector<1x1x16xi1> to vector<1x16x16xi1>
    %114 = vector.broadcast %cst_36 : f32 to vector<1x16x16xf32>
    %115 = arith.select %113, %111, %114 : vector<1x16x16xi1>, vector<1x16x16xf32>
    %cst_37 = arith.constant dense<0xFF800000> : vector<1x16xf32>
    %116 = vector.multi_reduction <maximumf>, %115, %cst_37 [2] : vector<1x16x16xf32> to vector<1x16xf32>
    %117 = vector.shape_cast %116 : vector<1x16xf32> to vector<1x16x1xf32>
    %118 = vector.broadcast %117 : vector<1x16x1xf32> to vector<1x16x16xf32>
    %119 = arith.subf %115, %118 : vector<1x16x16xf32>
    %120 = math.exp %119 : vector<1x16x16xf32>
    %cst_38 = arith.constant dense<0.000000e+00> : vector<1x16xf32>
    %121 = vector.multi_reduction <add>, %120, %cst_38 [2] : vector<1x16x16xf32> to vector<1x16xf32>
    %122 = vector.shape_cast %121 : vector<1x16xf32> to vector<1x16x1xf32>
    %123 = tpu.reciprocal %122 {approx = true} : vector<1x16x1xf32> -> vector<1x16x1xf32>
    %124 = vector.broadcast %123 : vector<1x16x1xf32> to vector<1x16x16xf32>
    %125 = arith.mulf %120, %124 : vector<1x16x16xf32>
    %126 = arith.truncf %125 : vector<1x16x16xf32> to vector<1x16x16xbf16>
    %127 = vector.extract_strided_slice %37 {offsets = [0, 0, 24], sizes = [1, 16, 8], strides = [1, 1, 1]} : vector<1x16x32xf32> to vector<1x16x8xf32>
    %128 = arith.truncf %127 : vector<1x16x8xf32> to vector<1x16x8xbf16>
    "tpu.trace_start"() <{level = 10 : i32, message = "bqk,bkd->bqd"}> : () -> ()
    %cst_39 = arith.constant dense<0.000000e+00> : vector<1x16x8xf32>
    %129 = tpu.matmul %126, %128, %cst_39 {dimension_numbers = #tpu.dot_dimension_numbers<[2], [1], [1], [2], [0, 0, 0, 1, 1, 2], [0], [0]>} : vector<1x16x16xbf16>, vector<1x16x8xbf16>, vector<1x16x8xf32> -> vector<1x16x8xf32>
    "tpu.trace_stop"() : () -> ()
    %130 = tpu.concatenate %60, %83, %106, %129 in 2 : vector<1x16x8xf32>, vector<1x16x8xf32>, vector<1x16x8xf32>, vector<1x16x8xf32> -> vector<1x16x32xf32>
    %131 = vector.shape_cast %130 : vector<1x16x32xf32> to vector<16x32xf32>
    %132 = arith.truncf %131 : vector<16x32xf32> to vector<16x32xbf16>
    %c0_40 = arith.constant 0 : index
    %c0_41 = arith.constant 0 : index
    %133 = vector.load %arg4[%c0_40, %c0_41] : memref<32x32xbf16, #tpu.memory_space<vmem>>, vector<32x32xbf16>
    %cst_42 = arith.constant dense<0.000000e+00> : vector<16x32xf32>
    %134 = tpu.matmul %132, %133, %cst_42 {dimension_numbers = #tpu.dot_dimension_numbers<[1], [0], [0], [1], [0, 0, 1, 1], [], []>} : vector<16x32xbf16>, vector<32x32xbf16>, vector<16x32xf32> -> vector<16x32xf32>
    %135 = vector.broadcast %4 : vector<1x32xf32> to vector<16x32xf32>
    %136 = arith.addf %134, %135 : vector<16x32xf32>
    %137 = vector.shape_cast %136 : vector<16x32xf32> to vector<1x16x32xf32>
    %138 = arith.truncf %136 : vector<16x32xf32> to vector<16x32xbf16>
    %c0_43 = arith.constant 0 : index
    %c0_44 = arith.constant 0 : index
    %139 = vector.load %arg6[%c0_43, %c0_44] : memref<32x64xbf16, #tpu.memory_space<vmem>>, vector<32x64xbf16>
    %cst_45 = arith.constant dense<0.000000e+00> : vector<16x64xf32>
    %140 = tpu.matmul %138, %139, %cst_45 {dimension_numbers = #tpu.dot_dimension_numbers<[1], [0], [0], [1], [0, 0, 1, 1], [], []>} : vector<16x32xbf16>, vector<32x64xbf16>, vector<16x64xf32> -> vector<16x64xf32>
    %141 = vector.broadcast %6 : vector<1x64xf32> to vector<16x64xf32>
    %142 = arith.addf %140, %141 : vector<16x64xf32>
    %143 = vector.shape_cast %142 : vector<16x64xf32> to vector<1x16x64xf32>
    %144 = vector.extract_strided_slice %137 {offsets = [0, 8, 0], sizes = [1, 1, 32], strides = [1, 1, 1]} : vector<1x16x32xf32> to vector<1x1x32xf32>
    %145 = vector.shape_cast %144 : vector<1x1x32xf32> to vector<1x32xf32>
    %146 = arith.truncf %145 : vector<1x32xf32> to vector<1x32xbf16>
    %c0_46 = arith.constant 0 : index
    %c0_47 = arith.constant 0 : index
    %147 = vector.load %arg5[%c0_46, %c0_47] : memref<32x32xbf16, #tpu.memory_space<vmem>>, vector<32x32xbf16>
    %cst_48 = arith.constant dense<0.000000e+00> : vector<1x32xf32>
    %148 = tpu.matmul %146, %147, %cst_48 {dimension_numbers = #tpu.dot_dimension_numbers<[1], [0], [0], [1], [0, 0, 1, 1], [], []>} : vector<1x32xbf16>, vector<32x32xbf16>, vector<1x32xf32> -> vector<1x32xf32>
    %149 = arith.addf %148, %5 : vector<1x32xf32>
    %150 = vector.shape_cast %149 : vector<1x32xf32> to vector<1x1x32xf32>
    %151 = vector.extract_strided_slice %143 {offsets = [0, 0, 0], sizes = [1, 16, 32], strides = [1, 1, 1]} : vector<1x16x64xf32> to vector<1x16x32xf32>
    %152 = vector.extract_strided_slice %143 {offsets = [0, 0, 32], sizes = [1, 16, 32], strides = [1, 1, 1]} : vector<1x16x64xf32> to vector<1x16x32xf32>
    %153 = vector.extract_strided_slice %150 {offsets = [0, 0, 0], sizes = [1, 1, 8], strides = [1, 1, 1]} : vector<1x1x32xf32> to vector<1x1x8xf32>
    %154 = arith.truncf %153 : vector<1x1x8xf32> to vector<1x1x8xbf16>
    %155 = vector.extract_strided_slice %151 {offsets = [0, 0, 0], sizes = [1, 16, 8], strides = [1, 1, 1]} : vector<1x16x32xf32> to vector<1x16x8xf32>
    %156 = arith.truncf %155 : vector<1x16x8xf32> to vector<1x16x8xbf16>
    "tpu.trace_start"() <{level = 10 : i32, message = "bqd,bkd->bqk"}> : () -> ()
    %cst_49 = arith.constant dense<0.000000e+00> : vector<1x1x16xf32>
    %157 = tpu.matmul %154, %156, %cst_49 {dimension_numbers = #tpu.dot_dimension_numbers<[2], [2], [1], [1], [0, 0, 0, 1, 1, 1], [0], [0]>} : vector<1x1x8xbf16>, vector<1x16x8xbf16>, vector<1x1x16xf32> -> vector<1x1x16xf32>
    %cst_50 = arith.constant -1.000000e+30 : f32
    "tpu.trace_stop"() : () -> ()
    %158 = vector.broadcast %cst_50 : f32 to vector<1x1x16xf32>
    %159 = arith.select %28, %157, %158 : vector<1x1x16xi1>, vector<1x1x16xf32>
    %cst_51 = arith.constant dense<0xFF800000> : vector<1x1xf32>
    %160 = vector.multi_reduction <maximumf>, %159, %cst_51 [2] : vector<1x1x16xf32> to vector<1x1xf32>
    %161 = vector.shape_cast %160 : vector<1x1xf32> to vector<1x1x1xf32>
    %162 = vector.broadcast %161 : vector<1x1x1xf32> to vector<1x1x16xf32>
    %163 = arith.subf %159, %162 : vector<1x1x16xf32>
    %164 = math.exp %163 : vector<1x1x16xf32>
    %cst_52 = arith.constant dense<0.000000e+00> : vector<1x1xf32>
    %165 = vector.multi_reduction <add>, %164, %cst_52 [2] : vector<1x1x16xf32> to vector<1x1xf32>
    %166 = vector.shape_cast %165 : vector<1x1xf32> to vector<1x1x1xf32>
    %167 = tpu.reciprocal %166 {approx = true} : vector<1x1x1xf32> -> vector<1x1x1xf32>
    %168 = vector.broadcast %167 : vector<1x1x1xf32> to vector<1x1x16xf32>
    %169 = arith.mulf %164, %168 : vector<1x1x16xf32>
    %170 = arith.truncf %169 : vector<1x1x16xf32> to vector<1x1x16xbf16>
    %171 = vector.extract_strided_slice %152 {offsets = [0, 0, 0], sizes = [1, 16, 8], strides = [1, 1, 1]} : vector<1x16x32xf32> to vector<1x16x8xf32>
    %172 = arith.truncf %171 : vector<1x16x8xf32> to vector<1x16x8xbf16>
    "tpu.trace_start"() <{level = 10 : i32, message = "bqk,bkd->bqd"}> : () -> ()
    %cst_53 = arith.constant dense<0.000000e+00> : vector<1x1x8xf32>
    %173 = tpu.matmul %170, %172, %cst_53 {dimension_numbers = #tpu.dot_dimension_numbers<[2], [1], [1], [2], [0, 0, 0, 1, 1, 2], [0], [0]>} : vector<1x1x16xbf16>, vector<1x16x8xbf16>, vector<1x1x8xf32> -> vector<1x1x8xf32>
    "tpu.trace_stop"() : () -> ()
    %174 = vector.extract_strided_slice %150 {offsets = [0, 0, 8], sizes = [1, 1, 8], strides = [1, 1, 1]} : vector<1x1x32xf32> to vector<1x1x8xf32>
    %175 = arith.truncf %174 : vector<1x1x8xf32> to vector<1x1x8xbf16>
    %176 = vector.extract_strided_slice %151 {offsets = [0, 0, 8], sizes = [1, 16, 8], strides = [1, 1, 1]} : vector<1x16x32xf32> to vector<1x16x8xf32>
    %177 = arith.truncf %176 : vector<1x16x8xf32> to vector<1x16x8xbf16>
    "tpu.trace_start"() <{level = 10 : i32, message = "bqd,bkd->bqk"}> : () -> ()
    %cst_54 = arith.constant dense<0.000000e+00> : vector<1x1x16xf32>
    %178 = tpu.matmul %175, %177, %cst_54 {dimension_numbers = #tpu.dot_dimension_numbers<[2], [2], [1], [1], [0, 0, 0, 1, 1, 1], [0], [0]>} : vector<1x1x8xbf16>, vector<1x16x8xbf16>, vector<1x1x16xf32> -> vector<1x1x16xf32>
    %cst_55 = arith.constant -1.000000e+30 : f32
    "tpu.trace_stop"() : () -> ()
    %179 = vector.broadcast %cst_55 : f32 to vector<1x1x16xf32>
    %180 = arith.select %28, %178, %179 : vector<1x1x16xi1>, vector<1x1x16xf32>
    %cst_56 = arith.constant dense<0xFF800000> : vector<1x1xf32>
    %181 = vector.multi_reduction <maximumf>, %180, %cst_56 [2] : vector<1x1x16xf32> to vector<1x1xf32>
    %182 = vector.shape_cast %181 : vector<1x1xf32> to vector<1x1x1xf32>
    %183 = vector.broadcast %182 : vector<1x1x1xf32> to vector<1x1x16xf32>
    %184 = arith.subf %180, %183 : vector<1x1x16xf32>
    %185 = math.exp %184 : vector<1x1x16xf32>
    %cst_57 = arith.constant dense<0.000000e+00> : vector<1x1xf32>
    %186 = vector.multi_reduction <add>, %185, %cst_57 [2] : vector<1x1x16xf32> to vector<1x1xf32>
    %187 = vector.shape_cast %186 : vector<1x1xf32> to vector<1x1x1xf32>
    %188 = tpu.reciprocal %187 {approx = true} : vector<1x1x1xf32> -> vector<1x1x1xf32>
    %189 = vector.broadcast %188 : vector<1x1x1xf32> to vector<1x1x16xf32>
    %190 = arith.mulf %185, %189 : vector<1x1x16xf32>
    %191 = arith.truncf %190 : vector<1x1x16xf32> to vector<1x1x16xbf16>
    %192 = vector.extract_strided_slice %152 {offsets = [0, 0, 8], sizes = [1, 16, 8], strides = [1, 1, 1]} : vector<1x16x32xf32> to vector<1x16x8xf32>
    %193 = arith.truncf %192 : vector<1x16x8xf32> to vector<1x16x8xbf16>
    "tpu.trace_start"() <{level = 10 : i32, message = "bqk,bkd->bqd"}> : () -> ()
    %cst_58 = arith.constant dense<0.000000e+00> : vector<1x1x8xf32>
    %194 = tpu.matmul %191, %193, %cst_58 {dimension_numbers = #tpu.dot_dimension_numbers<[2], [1], [1], [2], [0, 0, 0, 1, 1, 2], [0], [0]>} : vector<1x1x16xbf16>, vector<1x16x8xbf16>, vector<1x1x8xf32> -> vector<1x1x8xf32>
    "tpu.trace_stop"() : () -> ()
    %195 = vector.extract_strided_slice %150 {offsets = [0, 0, 16], sizes = [1, 1, 8], strides = [1, 1, 1]} : vector<1x1x32xf32> to vector<1x1x8xf32>
    %196 = arith.truncf %195 : vector<1x1x8xf32> to vector<1x1x8xbf16>
    %197 = vector.extract_strided_slice %151 {offsets = [0, 0, 16], sizes = [1, 16, 8], strides = [1, 1, 1]} : vector<1x16x32xf32> to vector<1x16x8xf32>
    %198 = arith.truncf %197 : vector<1x16x8xf32> to vector<1x16x8xbf16>
    "tpu.trace_start"() <{level = 10 : i32, message = "bqd,bkd->bqk"}> : () -> ()
    %cst_59 = arith.constant dense<0.000000e+00> : vector<1x1x16xf32>
    %199 = tpu.matmul %196, %198, %cst_59 {dimension_numbers = #tpu.dot_dimension_numbers<[2], [2], [1], [1], [0, 0, 0, 1, 1, 1], [0], [0]>} : vector<1x1x8xbf16>, vector<1x16x8xbf16>, vector<1x1x16xf32> -> vector<1x1x16xf32>
    %cst_60 = arith.constant -1.000000e+30 : f32
    "tpu.trace_stop"() : () -> ()
    %200 = vector.broadcast %cst_60 : f32 to vector<1x1x16xf32>
    %201 = arith.select %28, %199, %200 : vector<1x1x16xi1>, vector<1x1x16xf32>
    %cst_61 = arith.constant dense<0xFF800000> : vector<1x1xf32>
    %202 = vector.multi_reduction <maximumf>, %201, %cst_61 [2] : vector<1x1x16xf32> to vector<1x1xf32>
    %203 = vector.shape_cast %202 : vector<1x1xf32> to vector<1x1x1xf32>
    %204 = vector.broadcast %203 : vector<1x1x1xf32> to vector<1x1x16xf32>
    %205 = arith.subf %201, %204 : vector<1x1x16xf32>
    %206 = math.exp %205 : vector<1x1x16xf32>
    %cst_62 = arith.constant dense<0.000000e+00> : vector<1x1xf32>
    %207 = vector.multi_reduction <add>, %206, %cst_62 [2] : vector<1x1x16xf32> to vector<1x1xf32>
    %208 = vector.shape_cast %207 : vector<1x1xf32> to vector<1x1x1xf32>
    %209 = tpu.reciprocal %208 {approx = true} : vector<1x1x1xf32> -> vector<1x1x1xf32>
    %210 = vector.broadcast %209 : vector<1x1x1xf32> to vector<1x1x16xf32>
    %211 = arith.mulf %206, %210 : vector<1x1x16xf32>
    %212 = arith.truncf %211 : vector<1x1x16xf32> to vector<1x1x16xbf16>
    %213 = vector.extract_strided_slice %152 {offsets = [0, 0, 16], sizes = [1, 16, 8], strides = [1, 1, 1]} : vector<1x16x32xf32> to vector<1x16x8xf32>
    %214 = arith.truncf %213 : vector<1x16x8xf32> to vector<1x16x8xbf16>
    "tpu.trace_start"() <{level = 10 : i32, message = "bqk,bkd->bqd"}> : () -> ()
    %cst_63 = arith.constant dense<0.000000e+00> : vector<1x1x8xf32>
    %215 = tpu.matmul %212, %214, %cst_63 {dimension_numbers = #tpu.dot_dimension_numbers<[2], [1], [1], [2], [0, 0, 0, 1, 1, 2], [0], [0]>} : vector<1x1x16xbf16>, vector<1x16x8xbf16>, vector<1x1x8xf32> -> vector<1x1x8xf32>
    "tpu.trace_stop"() : () -> ()
    %216 = vector.extract_strided_slice %150 {offsets = [0, 0, 24], sizes = [1, 1, 8], strides = [1, 1, 1]} : vector<1x1x32xf32> to vector<1x1x8xf32>
    %217 = arith.truncf %216 : vector<1x1x8xf32> to vector<1x1x8xbf16>
    %218 = vector.extract_strided_slice %151 {offsets = [0, 0, 24], sizes = [1, 16, 8], strides = [1, 1, 1]} : vector<1x16x32xf32> to vector<1x16x8xf32>
    %219 = arith.truncf %218 : vector<1x16x8xf32> to vector<1x16x8xbf16>
    "tpu.trace_start"() <{level = 10 : i32, message = "bqd,bkd->bqk"}> : () -> ()
    %cst_64 = arith.constant dense<0.000000e+00> : vector<1x1x16xf32>
    %220 = tpu.matmul %217, %219, %cst_64 {dimension_numbers = #tpu.dot_dimension_numbers<[2], [2], [1], [1], [0, 0, 0, 1, 1, 1], [0], [0]>} : vector<1x1x8xbf16>, vector<1x16x8xbf16>, vector<1x1x16xf32> -> vector<1x1x16xf32>
    %cst_65 = arith.constant -1.000000e+30 : f32
    "tpu.trace_stop"() : () -> ()
    %221 = vector.broadcast %cst_65 : f32 to vector<1x1x16xf32>
    %222 = arith.select %28, %220, %221 : vector<1x1x16xi1>, vector<1x1x16xf32>
    %cst_66 = arith.constant dense<0xFF800000> : vector<1x1xf32>
    %223 = vector.multi_reduction <maximumf>, %222, %cst_66 [2] : vector<1x1x16xf32> to vector<1x1xf32>
    %224 = vector.shape_cast %223 : vector<1x1xf32> to vector<1x1x1xf32>
    %225 = vector.broadcast %224 : vector<1x1x1xf32> to vector<1x1x16xf32>
    %226 = arith.subf %222, %225 : vector<1x1x16xf32>
    %227 = math.exp %226 : vector<1x1x16xf32>
    %cst_67 = arith.constant dense<0.000000e+00> : vector<1x1xf32>
    %228 = vector.multi_reduction <add>, %227, %cst_67 [2] : vector<1x1x16xf32> to vector<1x1xf32>
    %229 = vector.shape_cast %228 : vector<1x1xf32> to vector<1x1x1xf32>
    %230 = tpu.reciprocal %229 {approx = true} : vector<1x1x1xf32> -> vector<1x1x1xf32>
    %231 = vector.broadcast %230 : vector<1x1x1xf32> to vector<1x1x16xf32>
    %232 = arith.mulf %227, %231 : vector<1x1x16xf32>
    %233 = arith.truncf %232 : vector<1x1x16xf32> to vector<1x1x16xbf16>
    %234 = vector.extract_strided_slice %152 {offsets = [0, 0, 24], sizes = [1, 16, 8], strides = [1, 1, 1]} : vector<1x16x32xf32> to vector<1x16x8xf32>
    %235 = arith.truncf %234 : vector<1x16x8xf32> to vector<1x16x8xbf16>
    "tpu.trace_start"() <{level = 10 : i32, message = "bqk,bkd->bqd"}> : () -> ()
    %cst_68 = arith.constant dense<0.000000e+00> : vector<1x1x8xf32>
    %236 = tpu.matmul %233, %235, %cst_68 {dimension_numbers = #tpu.dot_dimension_numbers<[2], [1], [1], [2], [0, 0, 0, 1, 1, 2], [0], [0]>} : vector<1x1x16xbf16>, vector<1x16x8xbf16>, vector<1x1x8xf32> -> vector<1x1x8xf32>
    "tpu.trace_stop"() : () -> ()
    %237 = tpu.concatenate %173, %194, %215, %236 in 2 : vector<1x1x8xf32>, vector<1x1x8xf32>, vector<1x1x8xf32>, vector<1x1x8xf32> -> vector<1x1x32xf32>
    %238 = vector.shape_cast %237 : vector<1x1x32xf32> to vector<1x32xf32>
    %239 = arith.truncf %238 : vector<1x32xf32> to vector<1x32xbf16>
    %c0_69 = arith.constant 0 : index
    %c0_70 = arith.constant 0 : index
    %240 = vector.load %arg7[%c0_69, %c0_70] : memref<32x32xbf16, #tpu.memory_space<vmem>>, vector<32x32xbf16>
    %cst_71 = arith.constant dense<0.000000e+00> : vector<1x32xf32>
    %241 = tpu.matmul %239, %240, %cst_71 {dimension_numbers = #tpu.dot_dimension_numbers<[1], [0], [0], [1], [0, 0, 1, 1], [], []>} : vector<1x32xbf16>, vector<32x32xbf16>, vector<1x32xf32> -> vector<1x32xf32>
    %242 = arith.addf %241, %7 : vector<1x32xf32>
    %cst_72 = arith.constant dense<0.000000e+00> : vector<1xf32>
    %243 = vector.multi_reduction <add>, %242, %cst_72 [1] : vector<1x32xf32> to vector<1xf32>
    %244 = vector.shape_cast %243 : vector<1xf32> to vector<1x1xf32>
    %cst_73 = arith.constant 3.200000e+01 : f32
    %245 = vector.broadcast %cst_73 : f32 to vector<1x1xf32>
    %246 = arith.divf %244, %245 : vector<1x1xf32>
    %247 = vector.broadcast %246 : vector<1x1xf32> to vector<1x32xf32>
    %248 = arith.subf %242, %247 : vector<1x32xf32>
    %249 = arith.mulf %248, %248 : vector<1x32xf32>
    %cst_74 = arith.constant dense<0.000000e+00> : vector<1xf32>
    %250 = vector.multi_reduction <add>, %249, %cst_74 [1] : vector<1x32xf32> to vector<1xf32>
    %251 = vector.shape_cast %250 : vector<1xf32> to vector<1x1xf32>
    %cst_75 = arith.constant 3.200000e+01 : f32
    %252 = vector.broadcast %cst_75 : f32 to vector<1x1xf32>
    %253 = arith.divf %251, %252 : vector<1x1xf32>
    %254 = vector.broadcast %246 : vector<1x1xf32> to vector<1x32xf32>
    %255 = arith.subf %242, %254 : vector<1x32xf32>
    %cst_76 = arith.constant 9.99999974E-6 : f32
    %256 = vector.broadcast %cst_76 : f32 to vector<1x1xf32>
    %257 = arith.addf %253, %256 : vector<1x1xf32>
    %258 = math.rsqrt %257 : vector<1x1xf32>
    %259 = vector.broadcast %258 : vector<1x1xf32> to vector<1x32xf32>
    %260 = arith.mulf %255, %259 : vector<1x32xf32>
    %261 = arith.mulf %260, %8 : vector<1x32xf32>
    %262 = arith.addf %261, %9 : vector<1x32xf32>
    %263 = arith.truncf %262 : vector<1x32xf32> to vector<1x32xbf16>
    %c0_77 = arith.constant 0 : index
    %c0_78 = arith.constant 0 : index
    %264 = vector.load %arg8[%c0_77, %c0_78] : memref<32x128xbf16, #tpu.memory_space<vmem>>, vector<32x128xbf16>
    %cst_79 = arith.constant dense<0.000000e+00> : vector<1x128xf32>
    %265 = tpu.matmul %263, %264, %cst_79 {dimension_numbers = #tpu.dot_dimension_numbers<[1], [0], [0], [1], [0, 0, 1, 1], [], []>} : vector<1x32xbf16>, vector<32x128xbf16>, vector<1x128xf32> -> vector<1x128xf32>
    %266 = arith.addf %265, %10 : vector<1x128xf32>
    %267 = vector.shape_cast %266 : vector<1x128xf32> to vector<1x1x128xf32>
    %c0_80 = arith.constant 0 : index
    %c0_81 = arith.constant 0 : index
    %c0_82 = arith.constant 0 : index
    %268 = vector.load %arg10[%c0_80, %c0_81, %c0_82] : memref<1x1x128xf32, #tpu.memory_space<vmem>>, vector<1x1x128xf32>
    tpu.vector_store %arg10[%c0_80, %c0_81, %c0_82], %267 {strides = array<i32>} : memref<1x1x128xf32, #tpu.memory_space<vmem>>, vector<1x1x128xf32>,
    return
  }
  func.func @transform_0(%arg0: i32) -> (i32, i32, i32) {
    %c0_i32 = arith.constant 0 : i32
    %c0_i32_0 = arith.constant 0 : i32
    %c0_i32_1 = arith.constant 0 : i32
    return %arg0, %c0_i32, %c0_i32_0 : i32, i32, i32
  }
  func.func @transform_1(%arg0: i32) -> (i32, i32) {
    %c0_i32 = arith.constant 0 : i32
    %c0_i32_0 = arith.constant 0 : i32
    %c0_i32_1 = arith.constant 0 : i32
    return %c0_i32, %c0_i32_0 : i32, i32
  }
  func.func @transform_2(%arg0: i32) -> (i32, i32) {
    %c0_i32 = arith.constant 0 : i32
    %c0_i32_0 = arith.constant 0 : i32
    %c0_i32_1 = arith.constant 0 : i32
    return %c0_i32, %c0_i32_0 : i32, i32
  }
  func.func @transform_3(%arg0: i32) -> (i32, i32) {
    %c0_i32 = arith.constant 0 : i32
    %c0_i32_0 = arith.constant 0 : i32
    %c0_i32_1 = arith.constant 0 : i32
    return %c0_i32, %c0_i32_0 : i32, i32
  }
  func.func @transform_4(%arg0: i32) -> (i32, i32) {
    %c0_i32 = arith.constant 0 : i32
    %c0_i32_0 = arith.constant 0 : i32
    %c0_i32_1 = arith.constant 0 : i32
    return %c0_i32, %c0_i32_0 : i32, i32
  }
  func.func @transform_5(%arg0: i32) -> (i32, i32) {
    %c0_i32 = arith.constant 0 : i32
    %c0_i32_0 = arith.constant 0 : i32
    %c0_i32_1 = arith.constant 0 : i32
    return %c0_i32, %c0_i32_0 : i32, i32
  }
  func.func @transform_6(%arg0: i32) -> (i32, i32) {
    %c0_i32 = arith.constant 0 : i32
    %c0_i32_0 = arith.constant 0 : i32
    %c0_i32_1 = arith.constant 0 : i32
    return %c0_i32, %c0_i32_0 : i32, i32
  }
  func.func @transform_7(%arg0: i32) -> (i32, i32) {
    %c0_i32 = arith.constant 0 : i32
    %c0_i32_0 = arith.constant 0 : i32
    %c0_i32_1 = arith.constant 0 : i32
    return %c0_i32, %c0_i32_0 : i32, i32
  }
  func.func @transform_8(%arg0: i32) -> (i32, i32) {
    %c0_i32 = arith.constant 0 : i32
    %c0_i32_0 = arith.constant 0 : i32
    %c0_i32_1 = arith.constant 0 : i32
    return %c0_i32, %c0_i32_0 : i32, i32
  }
  func.func @transform_9(%arg0: i32) -> (i32, i32, i32) {
    %c0_i32 = arith.constant 0 : i32
    %c0_i32_0 = arith.constant 0 : i32
    %c0_i32_1 = arith.constant 0 : i32
    return %arg0, %c0_i32, %c0_i32_0 : i32, i32, i32
  }
}

</mosaic_0001>

<llo_original>
// kernel: tpu_custom_call.1
$region0: #{tpu_custom_call.1}
  #allocation0 [shape = 'u32[]', space=smem, size = 0x4, offset = 0x4, fixed_abs, tag = 'smem constant byte address 0x4 - core index']
  #allocation1 [shape = 'u32[144,128]{1,0:T(1,128)}', space=vmem, size = 0x12000, scoped, tag = 'internal scratch']
  #allocation2 [shape = 'bf16[1,16,32]{2,1,0:T(8,128)(2,1)}', space=vmem, size = 0x1000, scoped, tag = 'scratch operand']
  %s0 = inlined_call_operand.vmem [shape: bf16[2,8,768], index: 0, kind: input, shape index: {}]
  %s1 = inlined_call_operand.vmem [shape: bf16[768,32], index: 1, kind: input, shape index: {}]
  %s2 = inlined_call_operand.vmem [shape: bf16[32,96], index: 2, kind: input, shape index: {}]
  %s3 = inlined_call_operand.vmem [shape: bf16[32,32], index: 3, kind: input, shape index: {}]
  %s4 = inlined_call_operand.vmem [shape: bf16[32,32], index: 4, kind: input, shape index: {}]
  %s5 = inlined_call_operand.vmem [shape: bf16[32,64], index: 5, kind: input, shape index: {}]
  %s6 = inlined_call_operand.vmem [shape: bf16[32,32], index: 6, kind: input, shape index: {}]
  %s7 = inlined_call_operand.vmem [shape: bf16[32,128], index: 7, kind: input, shape index: {}]
  %s8 = inlined_call_operand.vmem [shape: f32[16,128], index: 8, kind: input, shape index: {}]
  %s9 = inlined_call_operand.hbm [shape: f32[2,1,128], index: 9, kind: output, shape index: {}]
  %s10 = sld [smem:[#allocation0]]
  $region69: #{tpu_custom_call.1} parent=0
    _
  %s12 = ssub.s32 1, %s10
  %s13 = scalar_select 0, %s12, %s10
  $region1: #{tpu_custom_call.1} parent=0
    #allocation3 [shape = 'u8[1024]{0}', space=vmem, size = 0x400, scoped, tag = 'output window, operand 0']
    #allocation4 [shape = 's32[2]{0}', space=sflag, size = 0x8, scoped, tag = 'scoped memory for tpu_custom_call.1']
    %14 = vsyncpa [#allocation4], 0
    %s15 = scalar_lea.sflag [#allocation4], 1
    %16 = vsyncpa %s15, 0
    loop: start=0, step=1, limit=4
    $region2: #{tpu_custom_call.1} parent=1 // loop_pre_header
      _
    $region3: #{tpu_custom_call.1} parent=1 // loop_header
      %s18 = sphi 0, %s22
      %p19 = scmp.ge.s32.totalorder %s18, 4
      %s28 = sphi 0, %s30
      %s31 = sphi 0, %s28
      %s32 = sphi 0, %s31
      %s48 = sphi 0, %s32
      %s52 = sphi 0, %s52
      %s54 = sphi 0, %s52
      %s55 = sphi 0, %s54
      %s69 = sphi 0, %s55
      %s73 = sphi 0, %s73
      %s75 = sphi 0, %s73
      %s76 = sphi 0, %s75
      %s90 = sphi 0, %s76
      %s94 = sphi 0, %s94
      %s96 = sphi 0, %s94
      %s97 = sphi 0, %s96
      %s111 = sphi 0, %s97
      %s115 = sphi 0, %s115
      %s117 = sphi 0, %s115
      %s118 = sphi 0, %s117
      %s132 = sphi 0, %s118
      %s136 = sphi 0, %s136
      %s138 = sphi 0, %s136
      %s139 = sphi 0, %s138
      %s153 = sphi 0, %s139
      %s157 = sphi 0, %s157
      %s159 = sphi 0, %s157
      %s160 = sphi 0, %s159
      %s174 = sphi 0, %s160
      %s178 = sphi 0, %s178
      %s180 = sphi 0, %s178
      %s181 = sphi 0, %s180
      %s195 = sphi 0, %s181
      %s199 = sphi 0, %s199
      %s201 = sphi 0, %s199
      %s202 = sphi 0, %s201
      %s216 = sphi 0, %s202
      %s222 = sphi 0, %s224
      %s225 = sphi 0, %s222
      %s226 = sphi 0, %s225
      %s242 = sphi 0, %s226
    $region4: #{tpu_custom_call.1} parent=1 // loop_header_branch
      %21 = sbr.rel (%p19) target = $region8
    $region5: #{tpu_custom_call.1} parent=1 // loop_body
      %s23 = ssub.s32 %s18, 1
      %s24 = ssub.s32 %s18, 2
      %s25 = sadd.s32 %s18, 1
      %s26 = ssub.s32 %s18, %s25
      %p27 = scmp.eq.s32.totalorder %s26, 0
      %s29 = sadd.s32 %s28, 1
      %s30 = scalar_select %p27, %s28, %s29
      %p33 = pneg %p27
      %p34 = scmp.eq.s32.totalorder %s18, 1
      %p35 = por %p33, %p34
      %p36 = scmp.ne.s32.totalorder %s28, %s31
      %p37 = scmp.eq.s32.totalorder %s18, 0
      %p38 = por %p36, %p37
      %p39 = scmp.ne.s32.totalorder %s28, %s31
      %p40 = scmp.eq.s32.totalorder %s23, 1
      %p41 = por %p39, %p40
      %p42 = scmp.ne.s32.totalorder %s31, %s32
      %p43 = scmp.eq.s32.totalorder %s23, 0
      %p44 = por %p42, %p43
      %p45 = scmp.ne.s32.totalorder %s31, %s32
      %p46 = scmp.eq.s32.totalorder %s24, 1
      %p47 = por %p45, %p46
      %p49 = scmp.ne.s32.totalorder %s32, %s48
      %p50 = scmp.eq.s32.totalorder %s24, 0
      %p51 = por %p49, %p50
      %s53 = sadd.s32 %s52, 1
      %p56 = scmp.eq.s32.totalorder %s18, 1
      %p57 = scmp.ne.s32.totalorder %s52, %s54
      %p58 = scmp.eq.s32.totalorder %s18, 0
      %p59 = por %p57, %p58
      %p60 = scmp.ne.s32.totalorder %s52, %s54
      %p61 = scmp.eq.s32.totalorder %s23, 1
      %p62 = por %p60, %p61
      %p63 = scmp.ne.s32.totalorder %s54, %s55
      %p64 = scmp.eq.s32.totalorder %s23, 0
      %p65 = por %p63, %p64
      %p66 = scmp.ne.s32.totalorder %s54, %s55
      %p67 = scmp.eq.s32.totalorder %s24, 1
      %p68 = por %p66, %p67
      %p70 = scmp.ne.s32.totalorder %s55, %s69
      %p71 = scmp.eq.s32.totalorder %s24, 0
      %p72 = por %p70, %p71
      %s74 = sadd.s32 %s73, 1
      %p77 = scmp.eq.s32.totalorder %s18, 1
      %p78 = scmp.ne.s32.totalorder %s73, %s75
      %p79 = scmp.eq.s32.totalorder %s18, 0
      %p80 = por %p78, %p79
      %p81 = scmp.ne.s32.totalorder %s73, %s75
      %p82 = scmp.eq.s32.totalorder %s23, 1
      %p83 = por %p81, %p82
      %p84 = scmp.ne.s32.totalorder %s75, %s76
      %p85 = scmp.eq.s32.totalorder %s23, 0
      %p86 = por %p84, %p85
      %p87 = scmp.ne.s32.totalorder %s75, %s76
      %p88 = scmp.eq.s32.totalorder %s24, 1
      %p89 = por %p87, %p88
      %p91 = scmp.ne.s32.totalorder %s76, %s90
      %p92 = scmp.eq.s32.totalorder %s24, 0
      %p93 = por %p91, %p92
      %s95 = sadd.s32 %s94, 1
      %p98 = scmp.eq.s32.totalorder %s18, 1
      %p99 = scmp.ne.s32.totalorder %s94, %s96
      %p100 = scmp.eq.s32.totalorder %s18, 0
      %p101 = por %p99, %p100
      %p102 = scmp.ne.s32.totalorder %s94, %s96
      %p103 = scmp.eq.s32.totalorder %s23, 1
      %p104 = por %p102, %p103
      %p105 = scmp.ne.s32.totalorder %s96, %s97
      %p106 = scmp.eq.s32.totalorder %s23, 0
      %p107 = por %p105, %p106
      %p108 = scmp.ne.s32.totalorder %s96, %s97
      %p109 = scmp.eq.s32.totalorder %s24, 1
      %p110 = por %p108, %p109
      %p112 = scmp.ne.s32.totalorder %s97, %s111
      %p113 = scmp.eq.s32.totalorder %s24, 0
      %p114 = por %p112, %p113
      %s116 = sadd.s32 %s115, 1
      %p119 = scmp.eq.s32.totalorder %s18, 1
      %p120 = scmp.ne.s32.totalorder %s115, %s117
      %p121 = scmp.eq.s32.totalorder %s18, 0
      %p122 = por %p120, %p121
      %p123 = scmp.ne.s32.totalorder %s115, %s117
      %p124 = scmp.eq.s32.totalorder %s23, 1
      %p125 = por %p123, %p124
      %p126 = scmp.ne.s32.totalorder %s117, %s118
      %p127 = scmp.eq.s32.totalorder %s23, 0
      %p128 = por %p126, %p127
      %p129 = scmp.ne.s32.totalorder %s117, %s118
      %p130 = scmp.eq.s32.totalorder %s24, 1
      %p131 = por %p129, %p130
      %p133 = scmp.ne.s32.totalorder %s118, %s132
      %p134 = scmp.eq.s32.totalorder %s24, 0
      %p135 = por %p133, %p134
      %s137 = sadd.s32 %s136, 1
      %p140 = scmp.eq.s32.totalorder %s18, 1
      %p141 = scmp.ne.s32.totalorder %s136, %s138
      %p142 = scmp.eq.s32.totalorder %s18, 0
      %p143 = por %p141, %p142
      %p144 = scmp.ne.s32.totalorder %s136, %s138
      %p145 = scmp.eq.s32.totalorder %s23, 1
      %p146 = por %p144, %p145
      %p147 = scmp.ne.s32.totalorder %s138, %s139
      %p148 = scmp.eq.s32.totalorder %s23, 0
      %p149 = por %p147, %p148
      %p150 = scmp.ne.s32.totalorder %s138, %s139
      %p151 = scmp.eq.s32.totalorder %s24, 1
      %p152 = por %p150, %p151
      %p154 = scmp.ne.s32.totalorder %s139, %s153
      %p155 = scmp.eq.s32.totalorder %s24, 0
      %p156 = por %p154, %p155
      %s158 = sadd.s32 %s157, 1
      %p161 = scmp.eq.s32.totalorder %s18, 1
      %p162 = scmp.ne.s32.totalorder %s157, %s159
      %p163 = scmp.eq.s32.totalorder %s18, 0
      %p164 = por %p162, %p163
      %p165 = scmp.ne.s32.totalorder %s157, %s159
      %p166 = scmp.eq.s32.totalorder %s23, 1
      %p167 = por %p165, %p166
      %p168 = scmp.ne.s32.totalorder %s159, %s160
      %p169 = scmp.eq.s32.totalorder %s23, 0
      %p170 = por %p168, %p169
      %p171 = scmp.ne.s32.totalorder %s159, %s160
      %p172 = scmp.eq.s32.totalorder %s24, 1
      %p173 = por %p171, %p172
      %p175 = scmp.ne.s32.totalorder %s160, %s174
      %p176 = scmp.eq.s32.totalorder %s24, 0
      %p177 = por %p175, %p176
      %s179 = sadd.s32 %s178, 1
      %p182 = scmp.eq.s32.totalorder %s18, 1
      %p183 = scmp.ne.s32.totalorder %s178, %s180
      %p184 = scmp.eq.s32.totalorder %s18, 0
      %p185 = por %p183, %p184
      %p186 = scmp.ne.s32.totalorder %s178, %s180
      %p187 = scmp.eq.s32.totalorder %s23, 1
      %p188 = por %p186, %p187
      %p189 = scmp.ne.s32.totalorder %s180, %s181
      %p190 = scmp.eq.s32.totalorder %s23, 0
      %p191 = por %p189, %p190
      %p192 = scmp.ne.s32.totalorder %s180, %s181
      %p193 = scmp.eq.s32.totalorder %s24, 1
      %p194 = por %p192, %p193
      %p196 = scmp.ne.s32.totalorder %s181, %s195
      %p197 = scmp.eq.s32.totalorder %s24, 0
      %p198 = por %p196, %p197
      %s200 = sadd.s32 %s199, 1
      %p203 = scmp.eq.s32.totalorder %s18, 1
      %p204 = scmp.ne.s32.totalorder %s199, %s201
      %p205 = scmp.eq.s32.totalorder %s18, 0
      %p206 = por %p204, %p205
      %p207 = scmp.ne.s32.totalorder %s199, %s201
      %p208 = scmp.eq.s32.totalorder %s23, 1
      %p209 = por %p207, %p208
      %p210 = scmp.ne.s32.totalorder %s201, %s202
      %p211 = scmp.eq.s32.totalorder %s23, 0
      %p212 = por %p210, %p211
      %p213 = scmp.ne.s32.totalorder %s201, %s202
      %p214 = scmp.eq.s32.totalorder %s24, 1
      %p215 = por %p213, %p214
      %p217 = scmp.ne.s32.totalorder %s202, %s216
      %p218 = scmp.eq.s32.totalorder %s24, 0
      %p219 = por %p217, %p218
      %s220 = ssub.s32 %s18, %s25
      %p221 = scmp.eq.s32.totalorder %s220, 0
      %s223 = sadd.s32 %s222, 1
      %s224 = scalar_select %p221, %s222, %s223
      %p227 = pneg %p221
      %p228 = scmp.eq.s32.totalorder %s18, 1
      %p229 = por %p227, %p228
      %p230 = scmp.ne.s32.totalorder %s222, %s225
      %p231 = scmp.eq.s32.totalorder %s18, 0
      %p232 = por %p230, %p231
      %p233 = scmp.ne.s32.totalorder %s222, %s225
      %p234 = scmp.eq.s32.totalorder %s23, 1
      %p235 = por %p233, %p234
      %p236 = scmp.ne.s32.totalorder %s225, %s226
      %p237 = scmp.eq.s32.totalorder %s23, 0
      %p238 = por %p236, %p237
      %p239 = scmp.ne.s32.totalorder %s225, %s226
      %p240 = scmp.eq.s32.totalorder %s24, 1
      %p241 = por %p239, %p240
      %p243 = scmp.ne.s32.totalorder %s226, %s242
      %p244 = scmp.eq.s32.totalorder %s24, 0
      %p245 = por %p243, %p244
      %p246 = scmp.le.s32.totalorder 1, %s18
      %p247 = scmp.lt.s32.totalorder %s18, 3
      %p248 = pnand %p246, %p247
      %p249 = pneg %p248
      // Predicated region
      $region9: #{tpu_custom_call.1} parent=5 // pred_check
        _
      $region10: #{tpu_custom_call.1} parent=5 // pred_check_branch
        %251 = sbr.rel (%p248) target = $region12
      $region11: #{tpu_custom_call.1} parent=5 // pred_region
        %s252 = ssub.s32 %s18, 1
        // Predicated region
        $region13: #{tpu_custom_call.1} parent=11 // pred_check
          %p253 = pneg %p65
        $region14: #{tpu_custom_call.1} parent=11 // pred_check_branch
          %255 = sbr.rel (%p253) target = $region16
        $region15: #{tpu_custom_call.1} parent=11 // pred_region
          _
        $region16: #{tpu_custom_call.1} parent=11 // pred_fallthru
          _
        // Predicated region
        $region17: #{tpu_custom_call.1} parent=11 // pred_check
          %p256 = pneg %p86
        $region18: #{tpu_custom_call.1} parent=11 // pred_check_branch
          %258 = sbr.rel (%p256) target = $region20
        $region19: #{tpu_custom_call.1} parent=11 // pred_region
          _
        $region20: #{tpu_custom_call.1} parent=11 // pred_fallthru
          _
        // Predicated region
        $region21: #{tpu_custom_call.1} parent=11 // pred_check
          %p259 = pneg %p107
        $region22: #{tpu_custom_call.1} parent=11 // pred_check_branch
          %261 = sbr.rel (%p259) target = $region24
        $region23: #{tpu_custom_call.1} parent=11 // pred_region
          _
        $region24: #{tpu_custom_call.1} parent=11 // pred_fallthru
          _
        // Predicated region
        $region25: #{tpu_custom_call.1} parent=11 // pred_check
          %p262 = pneg %p128
        $region26: #{tpu_custom_call.1} parent=11 // pred_check_branch
          %264 = sbr.rel (%p262) target = $region28
        $region27: #{tpu_custom_call.1} parent=11 // pred_region
          _
        $region28: #{tpu_custom_call.1} parent=11 // pred_fallthru
          _
        // Predicated region
        $region29: #{tpu_custom_call.1} parent=11 // pred_check
          %p265 = pneg %p149
        $region30: #{tpu_custom_call.1} parent=11 // pred_check_branch
          %267 = sbr.rel (%p265) target = $region32
        $region31: #{tpu_custom_call.1} parent=11 // pred_region
          _
        $region32: #{tpu_custom_call.1} parent=11 // pred_fallthru
          _
        // Predicated region
        $region33: #{tpu_custom_call.1} parent=11 // pred_check
          %p268 = pneg %p170
        $region34: #{tpu_custom_call.1} parent=11 // pred_check_branch
          %270 = sbr.rel (%p268) target = $region36
        $region35: #{tpu_custom_call.1} parent=11 // pred_region
          _
        $region36: #{tpu_custom_call.1} parent=11 // pred_fallthru
          _
        // Predicated region
        $region37: #{tpu_custom_call.1} parent=11 // pred_check
          %p271 = pneg %p191
        $region38: #{tpu_custom_call.1} parent=11 // pred_check_branch
          %273 = sbr.rel (%p271) target = $region40
        $region39: #{tpu_custom_call.1} parent=11 // pred_region
          _
        $region40: #{tpu_custom_call.1} parent=11 // pred_fallthru
          _
        // Predicated region
        $region41: #{tpu_custom_call.1} parent=11 // pred_check
          %p274 = pneg %p212
        $region42: #{tpu_custom_call.1} parent=11 // pred_check_branch
          %276 = sbr.rel (%p274) target = $region44
        $region43: #{tpu_custom_call.1} parent=11 // pred_region
          _
        $region44: #{tpu_custom_call.1} parent=11 // pred_fallthru
          _
      $region12: #{tpu_custom_call.1} parent=5 // pred_fallthru
        _
      %p277 = scmp.lt.s32.totalorder %s18, 2
      // Predicated region
      $region45: #{tpu_custom_call.1} parent=5 // pred_check
        %p278 = pneg %p277
      $region46: #{tpu_custom_call.1} parent=5 // pred_check_branch
        %280 = sbr.rel (%p278) target = $region48
      $region47: #{tpu_custom_call.1} parent=5 // pred_region
        // Predicated region
        $region49: #{tpu_custom_call.1} parent=47 // pred_check
          %p281 = pneg %p38
        $region50: #{tpu_custom_call.1} parent=47 // pred_check_branch
          %283 = sbr.rel (%p281) target = $region52
        $region51: #{tpu_custom_call.1} parent=47 // pred_region
          %p284 = scmp.lt.s32.totalorder %s18, 1
          %s285 = scalar_select %p284, %s18, 1
          %s286 = smul.addr %s285, 6
          %s287 = smul.addr %s286, 4
          %s288 = scalar_lea.vmem %s0, %s287
        $region52: #{tpu_custom_call.1} parent=47 // pred_fallthru
          _
      $region48: #{tpu_custom_call.1} parent=5 // pred_fallthru
        _
      %p289 = scmp.le.s32.totalorder 1, %s18
      %p290 = scmp.lt.s32.totalorder %s18, 3
      %p291 = pnand %p289, %p290
      %p292 = pneg %p291
      // Predicated region
      $region53: #{tpu_custom_call.1} parent=5 // pred_check
        _
      $region54: #{tpu_custom_call.1} parent=5 // pred_check_branch
        %294 = sbr.rel (%p291) target = $region56
      $region55: #{tpu_custom_call.1} parent=5 // pred_region
        %s295 = ssub.s32 %s18, 1
        %p296 = scmp.lt.s32.totalorder %s23, 1
        %s297 = scalar_select %p296, %s23, 1
        %s298 = smul.addr %s297, 6
        %s299 = smul.addr %s298, 4
        %s300 = scalar_lea.vmem %s0, %s299
        %p301 = pneg %p44
        %p302 = pneg %p41
        %p303 = pneg %p65
        %p304 = pneg %p62
        %p305 = pneg %p86
        %p306 = pneg %p83
        %p307 = pneg %p107
        %p308 = pneg %p104
        %p309 = pneg %p128
        %p310 = pneg %p125
        %p311 = pneg %p149
        %p312 = pneg %p146
        %p313 = pneg %p170
        %p314 = pneg %p167
        %p315 = pneg %p191
        %p316 = pneg %p188
        %p317 = pneg %p212
        %p318 = pneg %p209
        %p319 = pneg %p238
        %p320 = pneg %p235
        %s321 = sand.u32 %s225, 1
        %s322 = scalar_lea.sflag [#allocation4], %s321
        %s323 = sand.u32 %s225, 1
        %s324 = scalar_lea.vmem [#allocation3], %s323
        %p325 = scmp.lt.s32.totalorder %s23, 1
        %s326 = scalar_select %p325, %s23, 1
        %s327 = smul.addr %s326, 6
        %s328 = smul.addr %s327, 4
        %s329 = scalar_lea.vmem %s0, %s328
        %v331 = vld [vmem:[%s8] sm:$0xff]
        %v332 = vld [vmem:[%s8 + $0x8] sm:$0xff]
        %v333 = vld [vmem:[%s329] sm:$0xff]
        %v334 = vld [vmem:[%s329 + $0x8] sm:$0xff]
        %v335 = vld [vmem:[%s329 + $0x10] sm:$0xff]
        %v336 = vld [vmem:[%s1] sm:$0xf]
        %v337 = vld [vmem:[%s1 + $0x4] sm:$0xf]
        %v338 = vld [vmem:[%s1 + $0x8] sm:$0xf]
        %v339 = vld [vmem:[%s1 + $0xc] sm:$0xf]
        %v340 = vld [vmem:[%s1 + $0x10] sm:$0xf]
        %v341 = vld [vmem:[%s1 + $0x14] sm:$0xf]
        %v342 = vld [vmem:[%s1 + $0x18] sm:$0xf]
        %v343 = vld [vmem:[%s1 + $0x1c] sm:$0xf]
        %v344 = vld [vmem:[%s1 + $0x20] sm:$0xf]
        %v345 = vld [vmem:[%s1 + $0x24] sm:$0xf]
        %v346 = vld [vmem:[%s1 + $0x28] sm:$0xf]
        %v347 = vld [vmem:[%s1 + $0x2c] sm:$0xf]
        %v348 = vld [vmem:[%s1 + $0x30] sm:$0xf]
        %v349 = vld [vmem:[%s1 + $0x34] sm:$0xf]
        %v350 = vld [vmem:[%s1 + $0x38] sm:$0xf]
        %v351 = vld [vmem:[%s1 + $0x3c] sm:$0xf]
        %v352 = vld [vmem:[%s1 + $0x40] sm:$0xf]
        %v353 = vld [vmem:[%s1 + $0x44] sm:$0xf]
        %v354 = vld [vmem:[%s1 + $0x48] sm:$0xf]
        %v355 = vld [vmem:[%s1 + $0x4c] sm:$0xf]
        %v356 = vld [vmem:[%s1 + $0x50] sm:$0xf]
        %v357 = vld [vmem:[%s1 + $0x54] sm:$0xf]
        %v358 = vld [vmem:[%s1 + $0x58] sm:$0xf]
        %v359 = vld [vmem:[%s1 + $0x5c] sm:$0xf]
        %v360 = vld [vmem:[%s1 + $0x60] sm:$0xf]
        %v361 = vld [vmem:[%s1 + $0x64] sm:$0xf]
        %v362 = vld [vmem:[%s1 + $0x68] sm:$0xf]
        %v363 = vld [vmem:[%s1 + $0x6c] sm:$0xf]
        %v364 = vld [vmem:[%s1 + $0x70] sm:$0xf]
        %v365 = vld [vmem:[%s1 + $0x74] sm:$0xf]
        %v366 = vld [vmem:[%s1 + $0x78] sm:$0xf]
        %v367 = vld [vmem:[%s1 + $0x7c] sm:$0xf]
        %v368 = vld [vmem:[%s1 + $0x80] sm:$0xf]
        %v369 = vld [vmem:[%s1 + $0x84] sm:$0xf]
        %v370 = vld [vmem:[%s1 + $0x88] sm:$0xf]
        %v371 = vld [vmem:[%s1 + $0x8c] sm:$0xf]
        %v372 = vld [vmem:[%s1 + $0x90] sm:$0xf]
        %v373 = vld [vmem:[%s1 + $0x94] sm:$0xf]
        %v374 = vld [vmem:[%s1 + $0x98] sm:$0xf]
        %v375 = vld [vmem:[%s1 + $0x9c] sm:$0xf]
        %v376 = vld [vmem:[%s1 + $0xa0] sm:$0xf]
        %v377 = vld [vmem:[%s1 + $0xa4] sm:$0xf]
        %v378 = vld [vmem:[%s1 + $0xa8] sm:$0xf]
        %v379 = vld [vmem:[%s1 + $0xac] sm:$0xf]
        %v380 = vld [vmem:[%s1 + $0xb0] sm:$0xf]
        %v381 = vld [vmem:[%s1 + $0xb4] sm:$0xf]
        %v382 = vld [vmem:[%s1 + $0xb8] sm:$0xf]
        %v383 = vld [vmem:[%s1 + $0xbc] sm:$0xf]
        %v384 = vld [vmem:[%s1 + $0xc0] sm:$0xf]
        %v385 = vld [vmem:[%s1 + $0xc4] sm:$0xf]
        %v386 = vld [vmem:[%s1 + $0xc8] sm:$0xf]
        %v387 = vld [vmem:[%s1 + $0xcc] sm:$0xf]
        %v388 = vld [vmem:[%s1 + $0xd0] sm:$0xf]
        %v389 = vld [vmem:[%s1 + $0xd4] sm:$0xf]
        %v390 = vld [vmem:[%s1 + $0xd8] sm:$0xf]
        %v391 = vld [vmem:[%s1 + $0xdc] sm:$0xf]
        %v392 = vld [vmem:[%s1 + $0xe0] sm:$0xf]
        %v393 = vld [vmem:[%s1 + $0xe4] sm:$0xf]
        %v394 = vld [vmem:[%s1 + $0xe8] sm:$0xf]
        %v395 = vld [vmem:[%s1 + $0xec] sm:$0xf]
        %v396 = vld [vmem:[%s1 + $0xf0] sm:$0xf]
        %v397 = vld [vmem:[%s1 + $0xf4] sm:$0xf]
        %v398 = vld [vmem:[%s1 + $0xf8] sm:$0xf]
        %v399 = vld [vmem:[%s1 + $0xfc] sm:$0xf]
        %v400 = vld [vmem:[%s1 + $0x100] sm:$0xf]
        %v401 = vld [vmem:[%s1 + $0x104] sm:$0xf]
        %v402 = vld [vmem:[%s1 + $0x108] sm:$0xf]
        %v403 = vld [vmem:[%s1 + $0x10c] sm:$0xf]
        %v404 = vld [vmem:[%s1 + $0x110] sm:$0xf]
        %v405 = vld [vmem:[%s1 + $0x114] sm:$0xf]
        %v406 = vld [vmem:[%s1 + $0x118] sm:$0xf]
        %v407 = vld [vmem:[%s1 + $0x11c] sm:$0xf]
        %v408 = vld [vmem:[%s1 + $0x120] sm:$0xf]
        %v409 = vld [vmem:[%s1 + $0x124] sm:$0xf]
        %v410 = vld [vmem:[%s1 + $0x128] sm:$0xf]
        %v411 = vld [vmem:[%s1 + $0x12c] sm:$0xf]
        %v412 = vld [vmem:[%s1 + $0x130] sm:$0xf]
        %v413 = vld [vmem:[%s1 + $0x134] sm:$0xf]
        %v414 = vld [vmem:[%s1 + $0x138] sm:$0xf]
        %v415 = vld [vmem:[%s1 + $0x13c] sm:$0xf]
        %v416 = vld [vmem:[%s1 + $0x140] sm:$0xf]
        %v417 = vld [vmem:[%s1 + $0x144] sm:$0xf]
        %v418 = vld [vmem:[%s1 + $0x148] sm:$0xf]
        %v419 = vld [vmem:[%s1 + $0x14c] sm:$0xf]
        %v420 = vld [vmem:[%s1 + $0x150] sm:$0xf]
        %v421 = vld [vmem:[%s1 + $0x154] sm:$0xf]
        %v422 = vld [vmem:[%s1 + $0x158] sm:$0xf]
        %v423 = vld [vmem:[%s1 + $0x15c] sm:$0xf]
        %v424 = vld [vmem:[%s1 + $0x160] sm:$0xf]
        %v425 = vld [vmem:[%s1 + $0x164] sm:$0xf]
        %v426 = vld [vmem:[%s1 + $0x168] sm:$0xf]
        %v427 = vld [vmem:[%s1 + $0x16c] sm:$0xf]
        %v428 = vld [vmem:[%s1 + $0x170] sm:$0xf]
        %v429 = vld [vmem:[%s1 + $0x174] sm:$0xf]
        %v430 = vld [vmem:[%s1 + $0x178] sm:$0xf]
        %v431 = vld [vmem:[%s1 + $0x17c] sm:$0xf]
        %v432 = vlaneseq
        %v433 = vshrl.u32 %v432, 7
        %v434 = vsub.s32 1, %v433
        %v435 = vrot.slane %v331, %v434
        %v439 = vunpack.c.l.b16 %v333
        %v440 = vunpack.c.h.b16 %v333
        %v441 = vunpack.c.l.b16 %v334
        %v442 = vunpack.c.h.b16 %v334
        %v443 = vunpack.c.l.b16 %v335
        %v444 = vunpack.c.h.b16 %v335
        %v445 = vpack.c.b16 %v439, %v439
        %v446 = vpack.c.b16 %v440, %v440
        %v447 = vpack.c.b16 %v441, %v441
        %v448 = vpack.c.b16 %v442, %v442
        %v449 = vpack.c.b16 %v443, %v443
        %v450 = vpack.c.b16 %v444, %v444
        %v553 = vunpack.c.l.b16 %v336
        %v554 = vunpack.c.l.b16 %v337
        %v555 = vunpack.c.l.b16 %v338
        %v556 = vunpack.c.l.b16 %v339
        %v557 = vunpack.c.l.b16 %v340
        %v558 = vunpack.c.l.b16 %v341
        %v559 = vunpack.c.l.b16 %v342
        %v560 = vunpack.c.l.b16 %v343
        %v561 = vunpack.c.l.b16 %v344
        %v562 = vunpack.c.l.b16 %v345
        %v563 = vunpack.c.l.b16 %v346
        %v564 = vunpack.c.l.b16 %v347
        %v565 = vunpack.c.l.b16 %v348
        %v566 = vunpack.c.l.b16 %v349
        %v567 = vunpack.c.l.b16 %v350
        %v568 = vunpack.c.l.b16 %v351
        %v569 = vunpack.c.l.b16 %v352
        %v570 = vunpack.c.l.b16 %v353
        %v571 = vunpack.c.l.b16 %v354
        %v572 = vunpack.c.l.b16 %v355
        %v573 = vunpack.c.l.b16 %v356
        %v574 = vunpack.c.l.b16 %v357
        %v575 = vunpack.c.l.b16 %v358
        %v576 = vunpack.c.l.b16 %v359
        %v577 = vunpack.c.l.b16 %v360
        %v578 = vunpack.c.l.b16 %v361
        %v579 = vunpack.c.l.b16 %v362
        %v580 = vunpack.c.l.b16 %v363
        %v581 = vunpack.c.l.b16 %v364
        %v582 = vunpack.c.l.b16 %v365
        %v583 = vunpack.c.l.b16 %v366
        %v584 = vunpack.c.l.b16 %v367
        %v585 = vunpack.c.l.b16 %v368
        %v586 = vunpack.c.l.b16 %v369
        %v587 = vunpack.c.l.b16 %v370
        %v588 = vunpack.c.l.b16 %v371
        %v589 = vunpack.c.l.b16 %v372
        %v590 = vunpack.c.l.b16 %v373
        %v591 = vunpack.c.l.b16 %v374
        %v592 = vunpack.c.l.b16 %v375
        %v593 = vunpack.c.l.b16 %v376
        %v594 = vunpack.c.l.b16 %v377
        %v595 = vunpack.c.l.b16 %v378
        %v596 = vunpack.c.l.b16 %v379
        %v597 = vunpack.c.l.b16 %v380
        %v598 = vunpack.c.l.b16 %v381
        %v599 = vunpack.c.l.b16 %v382
        %v600 = vunpack.c.l.b16 %v383
        %v601 = vunpack.c.l.b16 %v384
        %v602 = vunpack.c.l.b16 %v385
        %v603 = vunpack.c.l.b16 %v386
        %v604 = vunpack.c.l.b16 %v387
        %v605 = vunpack.c.l.b16 %v388
        %v606 = vunpack.c.l.b16 %v389
        %v607 = vunpack.c.l.b16 %v390
        %v608 = vunpack.c.l.b16 %v391
        %v609 = vunpack.c.l.b16 %v392
        %v610 = vunpack.c.l.b16 %v393
        %v611 = vunpack.c.l.b16 %v394
        %v612 = vunpack.c.l.b16 %v395
        %v613 = vunpack.c.l.b16 %v396
        %v614 = vunpack.c.l.b16 %v397
        %v615 = vunpack.c.l.b16 %v398
        %v616 = vunpack.c.l.b16 %v399
        %v617 = vunpack.c.l.b16 %v400
        %v618 = vunpack.c.l.b16 %v401
        %v619 = vunpack.c.l.b16 %v402
        %v620 = vunpack.c.l.b16 %v403
        %v621 = vunpack.c.l.b16 %v404
        %v622 = vunpack.c.l.b16 %v405
        %v623 = vunpack.c.l.b16 %v406
        %v624 = vunpack.c.l.b16 %v407
        %v625 = vunpack.c.l.b16 %v408
        %v626 = vunpack.c.l.b16 %v409
        %v627 = vunpack.c.l.b16 %v410
        %v628 = vunpack.c.l.b16 %v411
        %v629 = vunpack.c.l.b16 %v412
        %v630 = vunpack.c.l.b16 %v413
        %v631 = vunpack.c.l.b16 %v414
        %v632 = vunpack.c.l.b16 %v415
        %v633 = vunpack.c.l.b16 %v416
        %v634 = vunpack.c.l.b16 %v417
        %v635 = vunpack.c.l.b16 %v418
        %v636 = vunpack.c.l.b16 %v419
        %v637 = vunpack.c.l.b16 %v420
        %v638 = vunpack.c.l.b16 %v421
        %v639 = vunpack.c.l.b16 %v422
        %v640 = vunpack.c.l.b16 %v423
        %v641 = vunpack.c.l.b16 %v424
        %v642 = vunpack.c.l.b16 %v425
        %v643 = vunpack.c.l.b16 %v426
        %v644 = vunpack.c.l.b16 %v427
        %v645 = vunpack.c.l.b16 %v428
        %v646 = vunpack.c.l.b16 %v429
        %v647 = vunpack.c.l.b16 %v430
        %v648 = vunpack.c.l.b16 %v431
        %v649 = vpack.c.b16 %v554, %v553
        %v650 = vpack.c.b16 %v556, %v555
        %v651 = vpack.c.b16 %v558, %v557
        %v652 = vpack.c.b16 %v560, %v559
        %v653 = vpack.c.b16 %v562, %v561
        %v654 = vpack.c.b16 %v564, %v563
        %v655 = vpack.c.b16 %v566, %v565
        %v656 = vpack.c.b16 %v568, %v567
        %v657 = vpack.c.b16 %v570, %v569
        %v658 = vpack.c.b16 %v572, %v571
        %v659 = vpack.c.b16 %v574, %v573
        %v660 = vpack.c.b16 %v576, %v575
        %v661 = vpack.c.b16 %v578, %v577
        %v662 = vpack.c.b16 %v580, %v579
        %v663 = vpack.c.b16 %v582, %v581
        %v664 = vpack.c.b16 %v584, %v583
        %v665 = vpack.c.b16 %v586, %v585
        %v666 = vpack.c.b16 %v588, %v587
        %v667 = vpack.c.b16 %v590, %v589
        %v668 = vpack.c.b16 %v592, %v591
        %v669 = vpack.c.b16 %v594, %v593
        %v670 = vpack.c.b16 %v596, %v595
        %v671 = vpack.c.b16 %v598, %v597
        %v672 = vpack.c.b16 %v600, %v599
        %v673 = vpack.c.b16 %v602, %v601
        %v674 = vpack.c.b16 %v604, %v603
        %v675 = vpack.c.b16 %v606, %v605
        %v676 = vpack.c.b16 %v608, %v607
        %v677 = vpack.c.b16 %v610, %v609
        %v678 = vpack.c.b16 %v612, %v611
        %v679 = vpack.c.b16 %v614, %v613
        %v680 = vpack.c.b16 %v616, %v615
        %v681 = vpack.c.b16 %v618, %v617
        %v682 = vpack.c.b16 %v620, %v619
        %v683 = vpack.c.b16 %v622, %v621
        %v684 = vpack.c.b16 %v624, %v623
        %v685 = vpack.c.b16 %v626, %v625
        %v686 = vpack.c.b16 %v628, %v627
        %v687 = vpack.c.b16 %v630, %v629
        %v688 = vpack.c.b16 %v632, %v631
        %v689 = vpack.c.b16 %v634, %v633
        %v690 = vpack.c.b16 %v636, %v635
        %v691 = vpack.c.b16 %v638, %v637
        %v692 = vpack.c.b16 %v640, %v639
        %v693 = vpack.c.b16 %v642, %v641
        %v694 = vpack.c.b16 %v644, %v643
        %v695 = vpack.c.b16 %v646, %v645
        %v696 = vpack.c.b16 %v648, %v647
        %745 = vmatprep.subr.bf16.mxu0 0
        %746 = vmatpush1.bf16.msra.mxu0 %v656
        %747 = vmatprep.subr.bf16.mxu0 0
        %748 = vmatpush1.bf16.msra.mxu0 %v655
        %749 = vmatprep.subr.bf16.mxu0 0
        %750 = vmatpush1.bf16.msra.mxu0 %v654
        %751 = vmatprep.subr.bf16.mxu0 0
        %752 = vmatpush1.bf16.msra.mxu0 %v653
        %753 = vmatprep.subr.bf16.mxu0 0
        %754 = vmatpush1.bf16.msra.mxu0 %v652
        %755 = vmatprep.subr.bf16.mxu0 0
        %756 = vmatpush1.bf16.msra.mxu0 %v651
        %757 = vmatprep.subr.bf16.mxu0 0
        %758 = vmatpush1.bf16.msra.mxu0 %v650
        %759 = vmatprep.subr.bf16.mxu0 0
        %760 = vmatpush1.bf16.msra.mxu0 %v649
        %761 = vmatprep.subr.bf16.mxu0 0
        %762 = vmatpush2.bf16.msra.mxu0 %v664
        %763 = vmatprep.subr.bf16.mxu0 0
        %764 = vmatpush2.bf16.msra.mxu0 %v663
        %765 = vmatprep.subr.bf16.mxu0 0
        %766 = vmatpush2.bf16.msra.mxu0 %v662
        %767 = vmatprep.subr.bf16.mxu0 0
        %768 = vmatpush2.bf16.msra.mxu0 %v661
        %769 = vmatprep.subr.bf16.mxu0 0
        %770 = vmatpush2.bf16.msra.mxu0 %v660
        %771 = vmatprep.subr.bf16.mxu0 0
        %772 = vmatpush2.bf16.msra.mxu0 %v659
        %773 = vmatprep.subr.bf16.mxu0 0
        %774 = vmatpush2.bf16.msra.mxu0 %v658
        %775 = vmatprep.subr.bf16.mxu0 0
        %776 = vmatpush2.bf16.msra.mxu0 %v657
        %777 = vmatprep.mubr.bf16.mxu0 %v446
        %778 = vmatmul.mubr.bf16.gmra.mxu0 %v445
        %v779 = vpop.f32.mrf.mxu0
        %v780 = vadd.f32 %v435, %v779
        %v781 = vpop.f32.mrf.mxu0
        %v782 = vpop.f32.mrf.mxu0
        %v783 = vpop.f32.mrf.mxu0
        %784 = vdwg.mxu0
        %785 = vmatprep.subr.bf16.mxu0 0
        %786 = vmatpush1.bf16.msra.mxu0 %v672
        %787 = vmatprep.subr.bf16.mxu0 0
        %788 = vmatpush1.bf16.msra.mxu0 %v671
        %789 = vmatprep.subr.bf16.mxu0 0
        %790 = vmatpush1.bf16.msra.mxu0 %v670
        %791 = vmatprep.subr.bf16.mxu0 0
        %792 = vmatpush1.bf16.msra.mxu0 %v669
        %793 = vmatprep.subr.bf16.mxu0 0
        %794 = vmatpush1.bf16.msra.mxu0 %v668
        %795 = vmatprep.subr.bf16.mxu0 0
        %796 = vmatpush1.bf16.msra.mxu0 %v667
        %797 = vmatprep.subr.bf16.mxu0 0
        %798 = vmatpush1.bf16.msra.mxu0 %v666
        %799 = vmatprep.subr.bf16.mxu0 0
        %800 = vmatpush1.bf16.msra.mxu0 %v665
        %801 = vmatprep.subr.bf16.mxu0 0
        %802 = vmatpush2.bf16.msra.mxu0 %v680
        %803 = vmatprep.subr.bf16.mxu0 0
        %804 = vmatpush2.bf16.msra.mxu0 %v679
        %805 = vmatprep.subr.bf16.mxu0 0
        %806 = vmatpush2.bf16.msra.mxu0 %v678
        %807 = vmatprep.subr.bf16.mxu0 0
        %808 = vmatpush2.bf16.msra.mxu0 %v677
        %809 = vmatprep.subr.bf16.mxu0 0
        %810 = vmatpush2.bf16.msra.mxu0 %v676
        %811 = vmatprep.subr.bf16.mxu0 0
        %812 = vmatpush2.bf16.msra.mxu0 %v675
        %813 = vmatprep.subr.bf16.mxu0 0
        %814 = vmatpush2.bf16.msra.mxu0 %v674
        %815 = vmatprep.subr.bf16.mxu0 0
        %816 = vmatpush2.bf16.msra.mxu0 %v673
        %817 = vmatprep.mubr.bf16.mxu0 %v448
        %818 = vmatmul.mubr.bf16.gmra.mxu0 %v447
        %v819 = vpop.f32.mrf.mxu0
        %v820 = vadd.f32 %v780, %v819
        %v821 = vpop.f32.mrf.mxu0
        %v822 = vpop.f32.mrf.mxu0
        %v823 = vpop.f32.mrf.mxu0
        %824 = vdwg.mxu0
        %825 = vmatprep.subr.bf16.mxu0 0
        %826 = vmatpush1.bf16.msra.mxu0 %v688
        %827 = vmatprep.subr.bf16.mxu0 0
        %828 = vmatpush1.bf16.msra.mxu0 %v687
        %829 = vmatprep.subr.bf16.mxu0 0
        %830 = vmatpush1.bf16.msra.mxu0 %v686
        %831 = vmatprep.subr.bf16.mxu0 0
        %832 = vmatpush1.bf16.msra.mxu0 %v685
        %833 = vmatprep.subr.bf16.mxu0 0
        %834 = vmatpush1.bf16.msra.mxu0 %v684
        %835 = vmatprep.subr.bf16.mxu0 0
        %836 = vmatpush1.bf16.msra.mxu0 %v683
        %837 = vmatprep.subr.bf16.mxu0 0
        %838 = vmatpush1.bf16.msra.mxu0 %v682
        %839 = vmatprep.subr.bf16.mxu0 0
        %840 = vmatpush1.bf16.msra.mxu0 %v681
        %841 = vmatprep.subr.bf16.mxu0 0
        %842 = vmatpush2.bf16.msra.mxu0 %v696
        %843 = vmatprep.subr.bf16.mxu0 0
        %844 = vmatpush2.bf16.msra.mxu0 %v695
        %845 = vmatprep.subr.bf16.mxu0 0
        %846 = vmatpush2.bf16.msra.mxu0 %v694
        %847 = vmatprep.subr.bf16.mxu0 0
        %848 = vmatpush2.bf16.msra.mxu0 %v693
        %849 = vmatprep.subr.bf16.mxu0 0
        %850 = vmatpush2.bf16.msra.mxu0 %v692
        %851 = vmatprep.subr.bf16.mxu0 0
        %852 = vmatpush2.bf16.msra.mxu0 %v691
        %853 = vmatprep.subr.bf16.mxu0 0
        %854 = vmatpush2.bf16.msra.mxu0 %v690
        %855 = vmatprep.subr.bf16.mxu0 0
        %856 = vmatpush2.bf16.msra.mxu0 %v689
        %857 = vmatprep.mubr.bf16.mxu0 %v450
        %858 = vmatmul.mubr.bf16.gmra.mxu0 %v449
        %v859 = vpop.f32.mrf.mxu0
        %v860 = vadd.f32 %v820, %v859
        %v861 = vpop.f32.mrf.mxu0
        %v862 = vpop.f32.mrf.mxu0
        %v863 = vpop.f32.mrf.mxu0
        %864 = vdwg.mxu0
        %v865 = vpack.c.bf16 %v860, %v860
        %vm866 = vcmask 257024
        %867 = vst.msk [vmem:[#allocation2] sm:$0xf] %vm866, %v865
        %v868 = vpack.c.bf16 %v331, %v331
        %vm869 = vcmask 253952
        %vm870 = vsmask.f32 256
        %vm871 = vmand %vm869, %vm870
        %v872 = vld [vmem:[#allocation2 + $0x4] sm:$0x1]
        %v873 = vsel %vm871, %v868, %v872
        %874 = vst [vmem:[#allocation2 + $0x4] sm:$0x1] %v873
        %vm875 = vcmask 257024
        %vm876 = vsmask.f32 7938
        %vm877 = vmand %vm875, %vm876
        %v878 = vld [vmem:[#allocation2 + $0x4] sm:$0xf]
        %v879 = vsel %vm877, 0, %v878
        %880 = vst [vmem:[#allocation2 + $0x4] sm:$0xf] %v879
        %v881 = vld [vmem:[#allocation2] sm:$0xf]
        %v882 = vld [vmem:[#allocation2 + $0x4] sm:$0xf]
        %v883 = vlaneseq
        %v884 = vand.u32 %v883, 127
        %vm885 = vcmp.lt.s32.totalorder %v884, 9
        %v886 = vld [vmem:[%s2] sm:$0xf]
        %v887 = vld [vmem:[%s2 + $0x4] sm:$0xf]
        %v888 = vld [vmem:[%s2 + $0x8] sm:$0xf]
        %v889 = vld [vmem:[%s2 + $0xc] sm:$0xf]
        %v890 = vlaneseq
        %v891 = vshrl.u32 %v890, 7
        %v892 = vsub.s32 2, %v891
        %v893 = vrot.slane %v331, %v892
        %v896 = vunpack.c.l.b16 %v881
        %v897 = vunpack.c.l.b16 %v882
        %v898 = vpack.c.b16 %v897, %v896
        %v903 = vunpack.c.l.b16 %v886
        %v904 = vunpack.c.l.b16 %v887
        %v905 = vunpack.c.l.b16 %v888
        %v906 = vunpack.c.l.b16 %v889
        %v907 = vpack.c.b16 %v904, %v903
        %v908 = vpack.c.b16 %v906, %v905
        %vm911 = vcmask 261120
        %v913 = vsel %vm911, %v898, 0
        %915 = vmatprep.subr.bf16.mxu0 0
        %916 = vmatpush1.bf16.msra.mxu0 0
        %917 = vmatprep.subr.bf16.mxu0 0
        %918 = vmatpush1.bf16.msra.mxu0 0
        %919 = vmatprep.subr.bf16.mxu0 0
        %920 = vmatpush1.bf16.msra.mxu0 0
        %921 = vmatprep.subr.bf16.mxu0 0
        %922 = vmatpush1.bf16.msra.mxu0 0
        %923 = vmatprep.subr.bf16.mxu0 0
        %924 = vmatpush1.bf16.msra.mxu0 0
        %925 = vmatprep.subr.bf16.mxu0 0
        %926 = vmatpush1.bf16.msra.mxu0 0
        %927 = vmatprep.subr.bf16.mxu0 0
        %928 = vmatpush1.bf16.msra.mxu0 %v908
        %929 = vmatprep.subr.bf16.mxu0 0
        %930 = vmatpush1.bf16.msra.mxu0 %v907
        %931 = vmatprep.subr.bf16.mxu0 0
        %932 = vmatpush2.bf16.msra.mxu0 0
        %933 = vmatprep.subr.bf16.mxu0 0
        %934 = vmatpush2.bf16.msra.mxu0 0
        %935 = vmatprep.subr.bf16.mxu0 0
        %936 = vmatpush2.bf16.msra.mxu0 0
        %937 = vmatprep.subr.bf16.mxu0 0
        %938 = vmatpush2.bf16.msra.mxu0 0
        %939 = vmatprep.subr.bf16.mxu0 0
        %940 = vmatpush2.bf16.msra.mxu0 0
        %941 = vmatprep.subr.bf16.mxu0 0
        %942 = vmatpush2.bf16.msra.mxu0 0
        %943 = vmatprep.subr.bf16.mxu0 0
        %944 = vmatpush2.bf16.msra.mxu0 0
        %945 = vmatprep.subr.bf16.mxu0 0
        %946 = vmatpush2.bf16.msra.mxu0 0
        %947 = vmatprep.mubr.bf16.mxu0 0
        %948 = vmatmul.mubr.bf16.gmra.mxu0 %v913
        %v949 = vpop.f32.mrf.mxu0
        %v950 = vadd.f32 %v893, %v949
        %v951 = vpop.f32.mrf.mxu0
        %v952 = vpop.f32.mrf.mxu0
        %v953 = vadd.f32 %v893, %v952
        %v954 = vpop.f32.mrf.mxu0
        %955 = vdwg.mxu0
        %v956 = vpack.c.bf16 %v953, %v950
        %958 = vrot.lane.b32.xlu0 %v956, 96
        %v959 = vpop.permute.xlu0 %958
        %vm960 = vcmask 64512
        %v962 = vsel %vm960, %v956, 0
        %v965 = vsel %vm960, %v959, 0
        %967 = vmatprep.subr.bf16.mxu0 0
        %968 = vmatpush1.bf16.xpose.msra.mxu0 0
        %969 = vmatprep.subr.bf16.mxu0 0
        %970 = vmatpush1.bf16.xpose.msra.mxu0 0
        %971 = vmatprep.subr.bf16.mxu0 0
        %972 = vmatpush1.bf16.xpose.msra.mxu0 0
        %973 = vmatprep.subr.bf16.mxu0 0
        %974 = vmatpush1.bf16.xpose.msra.mxu0 0
        %975 = vmatprep.subr.bf16.mxu0 0
        %976 = vmatpush1.bf16.xpose.msra.mxu0 0
        %977 = vmatprep.subr.bf16.mxu0 0
        %978 = vmatpush1.bf16.xpose.msra.mxu0 0
        %979 = vmatprep.subr.bf16.mxu0 0
        %980 = vmatpush1.bf16.xpose.msra.mxu0 0
        %981 = vmatprep.subr.bf16.mxu0 0
        %982 = vmatpush1.bf16.xpose.msra.mxu0 %v965
        %983 = vmatprep.subr.bf16.mxu0 0
        %984 = vmatpush2.bf16.xpose.msra.mxu0 0
        %985 = vmatprep.subr.bf16.mxu0 0
        %986 = vmatpush2.bf16.xpose.msra.mxu0 0
        %987 = vmatprep.subr.bf16.mxu0 0
        %988 = vmatpush2.bf16.xpose.msra.mxu0 0
        %989 = vmatprep.subr.bf16.mxu0 0
        %990 = vmatpush2.bf16.xpose.msra.mxu0 0
        %991 = vmatprep.subr.bf16.mxu0 0
        %992 = vmatpush2.bf16.xpose.msra.mxu0 0
        %993 = vmatprep.subr.bf16.mxu0 0
        %994 = vmatpush2.bf16.xpose.msra.mxu0 0
        %995 = vmatprep.subr.bf16.mxu0 0
        %996 = vmatpush2.bf16.xpose.msra.mxu0 0
        %997 = vmatprep.subr.bf16.mxu0 0
        %998 = vmatpush2.bf16.xpose.msra.mxu0 0
        %999 = vmatprep.mubr.bf16.mxu0 0
        %1000 = vmatmul.mubr.bf16.gmra.mxu0 %v962
        %v1001 = vpop.f32.mrf.mxu0
        %v1002 = vadd.f32 0.0, %v1001
        %v1003 = vpop.f32.mrf.mxu0
        %v1004 = vpop.f32.mrf.mxu0
        %v1005 = vadd.f32 0.0, %v1004
        %v1006 = vpop.f32.mrf.mxu0
        %1007 = vdwg.mxu0
        %v1008 = vsel %vm885, 1, 0
        %vm1009 = vcmp.eq.s32.totalorder %v1008, 1
        %v1010 = vsel %vm1009, %v1002, -1e+30
        %v1011 = vsel %vm1009, %v1005, -1e+30
        %vm1012 = vcmask 130048
        %v1013 = vsel %vm1012, %v1010, -inf
        %1014 = vmax.xlane.f32.xlu0 %v1013
        %v1015 = vpop.xlane.xlu0 %1014
        %v1016 = vsel %vm1012, %v1011, -inf
        %1017 = vmax.xlane.f32.xlu0 %v1016
        %v1018 = vpop.xlane.xlu0 %1017
        %v1019 = vsub.f32 %v1010, %v1015
        %v1020 = vsub.f32 %v1011, %v1018
        %v1021 = vmul.f32 %v1019, 1.442695
        %v1022 = vpow.pop %v1021
        %v1023 = vmul.f32 %v1020, 1.442695
        %v1024 = vpow.pop %v1023
        %v1025 = vsel %vm1012, %v1022, 0.0
        %1026 = vadd.xlane.f32.xlu0 %v1025
        %v1027 = vpop.xlane.xlu0 %1026
        %v1028 = vsel %vm1012, %v1024, 0.0
        %1029 = vadd.xlane.f32.xlu0 %v1028
        %v1030 = vpop.xlane.xlu0 %1029
        %v1031 = vrcp.pop %v1027
        %v1032 = vrcp.pop %v1030
        %v1033 = vmul.f32 %v1022, %v1031
        %v1034 = vmul.f32 %v1024, %v1032
        %v1035 = vpack.c.bf16 %v1034, %v1033
        %1036 = vrot.lane.b32.xlu0 %v956, 64
        %v1037 = vpop.permute.xlu0 %1036
        %v1040 = vsel %vm1012, %v1035, 0
        %1042 = vmatprep.subr.bf16.mxu0 0
        %1043 = vmatpush1.bf16.msra.mxu0 0
        %1044 = vmatprep.subr.bf16.mxu0 0
        %1045 = vmatpush1.bf16.msra.mxu0 0
        %1046 = vmatprep.subr.bf16.mxu0 0
        %1047 = vmatpush1.bf16.msra.mxu0 0
        %1048 = vmatprep.subr.bf16.mxu0 0
        %1049 = vmatpush1.bf16.msra.mxu0 0
        %1050 = vmatprep.subr.bf16.mxu0 0
        %1051 = vmatpush1.bf16.msra.mxu0 0
        %1052 = vmatprep.subr.bf16.mxu0 0
        %1053 = vmatpush1.bf16.msra.mxu0 0
        %1054 = vmatprep.subr.bf16.mxu0 0
        %1055 = vmatpush1.bf16.msra.mxu0 0
        %1056 = vmatprep.subr.bf16.mxu0 0
        %1057 = vmatpush1.bf16.msra.mxu0 %v1037
        %1058 = vmatprep.subr.bf16.mxu0 0
        %1059 = vmatpush2.bf16.msra.mxu0 0
        %1060 = vmatprep.subr.bf16.mxu0 0
        %1061 = vmatpush2.bf16.msra.mxu0 0
        %1062 = vmatprep.subr.bf16.mxu0 0
        %1063 = vmatpush2.bf16.msra.mxu0 0
        %1064 = vmatprep.subr.bf16.mxu0 0
        %1065 = vmatpush2.bf16.msra.mxu0 0
        %1066 = vmatprep.subr.bf16.mxu0 0
        %1067 = vmatpush2.bf16.msra.mxu0 0
        %1068 = vmatprep.subr.bf16.mxu0 0
        %1069 = vmatpush2.bf16.msra.mxu0 0
        %1070 = vmatprep.subr.bf16.mxu0 0
        %1071 = vmatpush2.bf16.msra.mxu0 0
        %1072 = vmatprep.subr.bf16.mxu0 0
        %1073 = vmatpush2.bf16.msra.mxu0 0
        %1074 = vmatprep.mubr.bf16.mxu0 0
        %1075 = vmatmul.mubr.bf16.gmra.mxu0 %v1040
        %v1076 = vpop.f32.mrf.mxu0
        %v1077 = vadd.f32 0.0, %v1076
        %v1078 = vpop.f32.mrf.mxu0
        %v1079 = vpop.f32.mrf.mxu0
        %v1080 = vadd.f32 0.0, %v1079
        %v1081 = vpop.f32.mrf.mxu0
        %1082 = vdwg.mxu0
        %1083 = vrot.lane.b32.xlu0 %v956, 120
        %v1084 = vpop.permute.xlu0 %1083
        %1085 = vrot.lane.b32.xlu0 %v956, 88
        %v1086 = vpop.permute.xlu0 %1085
        %v1088 = vsel %vm960, %v1084, 0
        %v1091 = vsel %vm960, %v1086, 0
        %1093 = vmatprep.subr.bf16.mxu0 0
        %1094 = vmatpush1.bf16.xpose.msra.mxu0 0
        %1095 = vmatprep.subr.bf16.mxu0 0
        %1096 = vmatpush1.bf16.xpose.msra.mxu0 0
        %1097 = vmatprep.subr.bf16.mxu0 0
        %1098 = vmatpush1.bf16.xpose.msra.mxu0 0
        %1099 = vmatprep.subr.bf16.mxu0 0
        %1100 = vmatpush1.bf16.xpose.msra.mxu0 0
        %1101 = vmatprep.subr.bf16.mxu0 0
        %1102 = vmatpush1.bf16.xpose.msra.mxu0 0
        %1103 = vmatprep.subr.bf16.mxu0 0
        %1104 = vmatpush1.bf16.xpose.msra.mxu0 0
        %1105 = vmatprep.subr.bf16.mxu0 0
        %1106 = vmatpush1.bf16.xpose.msra.mxu0 0
        %1107 = vmatprep.subr.bf16.mxu0 0
        %1108 = vmatpush1.bf16.xpose.msra.mxu0 %v1091
        %1109 = vmatprep.subr.bf16.mxu0 0
        %1110 = vmatpush2.bf16.xpose.msra.mxu0 0
        %1111 = vmatprep.subr.bf16.mxu0 0
        %1112 = vmatpush2.bf16.xpose.msra.mxu0 0
        %1113 = vmatprep.subr.bf16.mxu0 0
        %1114 = vmatpush2.bf16.xpose.msra.mxu0 0
        %1115 = vmatprep.subr.bf16.mxu0 0
        %1116 = vmatpush2.bf16.xpose.msra.mxu0 0
        %1117 = vmatprep.subr.bf16.mxu0 0
        %1118 = vmatpush2.bf16.xpose.msra.mxu0 0
        %1119 = vmatprep.subr.bf16.mxu0 0
        %1120 = vmatpush2.bf16.xpose.msra.mxu0 0
        %1121 = vmatprep.subr.bf16.mxu0 0
        %1122 = vmatpush2.bf16.xpose.msra.mxu0 0
        %1123 = vmatprep.subr.bf16.mxu0 0
        %1124 = vmatpush2.bf16.xpose.msra.mxu0 0
        %1125 = vmatprep.mubr.bf16.mxu0 0
        %1126 = vmatmul.mubr.bf16.gmra.mxu0 %v1088
        %v1127 = vpop.f32.mrf.mxu0
        %v1128 = vadd.f32 0.0, %v1127
        %v1129 = vpop.f32.mrf.mxu0
        %v1130 = vpop.f32.mrf.mxu0
        %v1131 = vadd.f32 0.0, %v1130
        %v1132 = vpop.f32.mrf.mxu0
        %1133 = vdwg.mxu0
        %v1134 = vsel %vm1009, %v1128, -1e+30
        %v1135 = vsel %vm1009, %v1131, -1e+30
        %v1136 = vsel %vm1012, %v1134, -inf
        %1137 = vmax.xlane.f32.xlu0 %v1136
        %v1138 = vpop.xlane.xlu0 %1137
        %v1139 = vsel %vm1012, %v1135, -inf
        %1140 = vmax.xlane.f32.xlu0 %v1139
        %v1141 = vpop.xlane.xlu0 %1140
        %v1142 = vsub.f32 %v1134, %v1138
        %v1143 = vsub.f32 %v1135, %v1141
        %v1144 = vmul.f32 %v1142, 1.442695
        %v1145 = vpow.pop %v1144
        %v1146 = vmul.f32 %v1143, 1.442695
        %v1147 = vpow.pop %v1146
        %v1148 = vsel %vm1012, %v1145, 0.0
        %1149 = vadd.xlane.f32.xlu0 %v1148
        %v1150 = vpop.xlane.xlu0 %1149
        %v1151 = vsel %vm1012, %v1147, 0.0
        %1152 = vadd.xlane.f32.xlu0 %v1151
        %v1153 = vpop.xlane.xlu0 %1152
        %v1154 = vrcp.pop %v1150
        %v1155 = vrcp.pop %v1153
        %v1156 = vmul.f32 %v1145, %v1154
        %v1157 = vmul.f32 %v1147, %v1155
        %v1158 = vpack.c.bf16 %v1157, %v1156
        %1159 = vrot.lane.b32.xlu0 %v956, 56
        %v1160 = vpop.permute.xlu0 %1159
        %v1163 = vsel %vm1012, %v1158, 0
        %1165 = vmatprep.subr.bf16.mxu0 0
        %1166 = vmatpush1.bf16.msra.mxu0 0
        %1167 = vmatprep.subr.bf16.mxu0 0
        %1168 = vmatpush1.bf16.msra.mxu0 0
        %1169 = vmatprep.subr.bf16.mxu0 0
        %1170 = vmatpush1.bf16.msra.mxu0 0
        %1171 = vmatprep.subr.bf16.mxu0 0
        %1172 = vmatpush1.bf16.msra.mxu0 0
        %1173 = vmatprep.subr.bf16.mxu0 0
        %1174 = vmatpush1.bf16.msra.mxu0 0
        %1175 = vmatprep.subr.bf16.mxu0 0
        %1176 = vmatpush1.bf16.msra.mxu0 0
        %1177 = vmatprep.subr.bf16.mxu0 0
        %1178 = vmatpush1.bf16.msra.mxu0 0
        %1179 = vmatprep.subr.bf16.mxu0 0
        %1180 = vmatpush1.bf16.msra.mxu0 %v1160
        %1181 = vmatprep.subr.bf16.mxu0 0
        %1182 = vmatpush2.bf16.msra.mxu0 0
        %1183 = vmatprep.subr.bf16.mxu0 0
        %1184 = vmatpush2.bf16.msra.mxu0 0
        %1185 = vmatprep.subr.bf16.mxu0 0
        %1186 = vmatpush2.bf16.msra.mxu0 0
        %1187 = vmatprep.subr.bf16.mxu0 0
        %1188 = vmatpush2.bf16.msra.mxu0 0
        %1189 = vmatprep.subr.bf16.mxu0 0
        %1190 = vmatpush2.bf16.msra.mxu0 0
        %1191 = vmatprep.subr.bf16.mxu0 0
        %1192 = vmatpush2.bf16.msra.mxu0 0
        %1193 = vmatprep.subr.bf16.mxu0 0
        %1194 = vmatpush2.bf16.msra.mxu0 0
        %1195 = vmatprep.subr.bf16.mxu0 0
        %1196 = vmatpush2.bf16.msra.mxu0 0
        %1197 = vmatprep.mubr.bf16.mxu0 0
        %1198 = vmatmul.mubr.bf16.gmra.mxu0 %v1163
        %v1199 = vpop.f32.mrf.mxu0
        %v1200 = vadd.f32 0.0, %v1199
        %v1201 = vpop.f32.mrf.mxu0
        %v1202 = vpop.f32.mrf.mxu0
        %v1203 = vadd.f32 0.0, %v1202
        %v1204 = vpop.f32.mrf.mxu0
        %1205 = vdwg.mxu0
        %1206 = vrot.lane.b32.xlu0 %v956, 112
        %v1207 = vpop.permute.xlu0 %1206
        %1208 = vrot.lane.b32.xlu0 %v956, 80
        %v1209 = vpop.permute.xlu0 %1208
        %v1211 = vsel %vm960, %v1207, 0
        %v1214 = vsel %vm960, %v1209, 0
        %1216 = vmatprep.subr.bf16.mxu0 0
        %1217 = vmatpush1.bf16.xpose.msra.mxu0 0
        %1218 = vmatprep.subr.bf16.mxu0 0
        %1219 = vmatpush1.bf16.xpose.msra.mxu0 0
        %1220 = vmatprep.subr.bf16.mxu0 0
        %1221 = vmatpush1.bf16.xpose.msra.mxu0 0
        %1222 = vmatprep.subr.bf16.mxu0 0
        %1223 = vmatpush1.bf16.xpose.msra.mxu0 0
        %1224 = vmatprep.subr.bf16.mxu0 0
        %1225 = vmatpush1.bf16.xpose.msra.mxu0 0
        %1226 = vmatprep.subr.bf16.mxu0 0
        %1227 = vmatpush1.bf16.xpose.msra.mxu0 0
        %1228 = vmatprep.subr.bf16.mxu0 0
        %1229 = vmatpush1.bf16.xpose.msra.mxu0 0
        %1230 = vmatprep.subr.bf16.mxu0 0
        %1231 = vmatpush1.bf16.xpose.msra.mxu0 %v1214
        %1232 = vmatprep.subr.bf16.mxu0 0
        %1233 = vmatpush2.bf16.xpose.msra.mxu0 0
        %1234 = vmatprep.subr.bf16.mxu0 0
        %1235 = vmatpush2.bf16.xpose.msra.mxu0 0
        %1236 = vmatprep.subr.bf16.mxu0 0
        %1237 = vmatpush2.bf16.xpose.msra.mxu0 0
        %1238 = vmatprep.subr.bf16.mxu0 0
        %1239 = vmatpush2.bf16.xpose.msra.mxu0 0
        %1240 = vmatprep.subr.bf16.mxu0 0
        %1241 = vmatpush2.bf16.xpose.msra.mxu0 0
        %1242 = vmatprep.subr.bf16.mxu0 0
        %1243 = vmatpush2.bf16.xpose.msra.mxu0 0
        %1244 = vmatprep.subr.bf16.mxu0 0
        %1245 = vmatpush2.bf16.xpose.msra.mxu0 0
        %1246 = vmatprep.subr.bf16.mxu0 0
        %1247 = vmatpush2.bf16.xpose.msra.mxu0 0
        %1248 = vmatprep.mubr.bf16.mxu0 0
        %1249 = vmatmul.mubr.bf16.gmra.mxu0 %v1211
        %v1250 = vpop.f32.mrf.mxu0
        %v1251 = vadd.f32 0.0, %v1250
        %v1252 = vpop.f32.mrf.mxu0
        %v1253 = vpop.f32.mrf.mxu0
        %v1254 = vadd.f32 0.0, %v1253
        %v1255 = vpop.f32.mrf.mxu0
        %1256 = vdwg.mxu0
        %v1257 = vsel %vm1009, %v1251, -1e+30
        %v1258 = vsel %vm1009, %v1254, -1e+30
        %v1259 = vsel %vm1012, %v1257, -inf
        %1260 = vmax.xlane.f32.xlu0 %v1259
        %v1261 = vpop.xlane.xlu0 %1260
        %v1262 = vsel %vm1012, %v1258, -inf
        %1263 = vmax.xlane.f32.xlu0 %v1262
        %v1264 = vpop.xlane.xlu0 %1263
        %v1265 = vsub.f32 %v1257, %v1261
        %v1266 = vsub.f32 %v1258, %v1264
        %v1267 = vmul.f32 %v1265, 1.442695
        %v1268 = vpow.pop %v1267
        %v1269 = vmul.f32 %v1266, 1.442695
        %v1270 = vpow.pop %v1269
        %v1271 = vsel %vm1012, %v1268, 0.0
        %1272 = vadd.xlane.f32.xlu0 %v1271
        %v1273 = vpop.xlane.xlu0 %1272
        %v1274 = vsel %vm1012, %v1270, 0.0
        %1275 = vadd.xlane.f32.xlu0 %v1274
        %v1276 = vpop.xlane.xlu0 %1275
        %v1277 = vrcp.pop %v1273
        %v1278 = vrcp.pop %v1276
        %v1279 = vmul.f32 %v1268, %v1277
        %v1280 = vmul.f32 %v1270, %v1278
        %v1281 = vpack.c.bf16 %v1280, %v1279
        %1282 = vrot.lane.b32.xlu0 %v956, 48
        %v1283 = vpop.permute.xlu0 %1282
        %v1286 = vsel %vm1012, %v1281, 0
        %1288 = vmatprep.subr.bf16.mxu0 0
        %1289 = vmatpush1.bf16.msra.mxu0 0
        %1290 = vmatprep.subr.bf16.mxu0 0
        %1291 = vmatpush1.bf16.msra.mxu0 0
        %1292 = vmatprep.subr.bf16.mxu0 0
        %1293 = vmatpush1.bf16.msra.mxu0 0
        %1294 = vmatprep.subr.bf16.mxu0 0
        %1295 = vmatpush1.bf16.msra.mxu0 0
        %1296 = vmatprep.subr.bf16.mxu0 0
        %1297 = vmatpush1.bf16.msra.mxu0 0
        %1298 = vmatprep.subr.bf16.mxu0 0
        %1299 = vmatpush1.bf16.msra.mxu0 0
        %1300 = vmatprep.subr.bf16.mxu0 0
        %1301 = vmatpush1.bf16.msra.mxu0 0
        %1302 = vmatprep.subr.bf16.mxu0 0
        %1303 = vmatpush1.bf16.msra.mxu0 %v1283
        %1304 = vmatprep.subr.bf16.mxu0 0
        %1305 = vmatpush2.bf16.msra.mxu0 0
        %1306 = vmatprep.subr.bf16.mxu0 0
        %1307 = vmatpush2.bf16.msra.mxu0 0
        %1308 = vmatprep.subr.bf16.mxu0 0
        %1309 = vmatpush2.bf16.msra.mxu0 0
        %1310 = vmatprep.subr.bf16.mxu0 0
        %1311 = vmatpush2.bf16.msra.mxu0 0
        %1312 = vmatprep.subr.bf16.mxu0 0
        %1313 = vmatpush2.bf16.msra.mxu0 0
        %1314 = vmatprep.subr.bf16.mxu0 0
        %1315 = vmatpush2.bf16.msra.mxu0 0
        %1316 = vmatprep.subr.bf16.mxu0 0
        %1317 = vmatpush2.bf16.msra.mxu0 0
        %1318 = vmatprep.subr.bf16.mxu0 0
        %1319 = vmatpush2.bf16.msra.mxu0 0
        %1320 = vmatprep.mubr.bf16.mxu0 0
        %1321 = vmatmul.mubr.bf16.gmra.mxu0 %v1286
        %v1322 = vpop.f32.mrf.mxu0
        %v1323 = vadd.f32 0.0, %v1322
        %v1324 = vpop.f32.mrf.mxu0
        %v1325 = vpop.f32.mrf.mxu0
        %v1326 = vadd.f32 0.0, %v1325
        %v1327 = vpop.f32.mrf.mxu0
        %1328 = vdwg.mxu0
        %1329 = vrot.lane.b32.xlu0 %v956, 104
        %v1330 = vpop.permute.xlu0 %1329
        %1331 = vrot.lane.b32.xlu0 %v956, 72
        %v1332 = vpop.permute.xlu0 %1331
        %v1334 = vsel %vm960, %v1330, 0
        %v1337 = vsel %vm960, %v1332, 0
        %1339 = vmatprep.subr.bf16.mxu0 0
        %1340 = vmatpush1.bf16.xpose.msra.mxu0 0
        %1341 = vmatprep.subr.bf16.mxu0 0
        %1342 = vmatpush1.bf16.xpose.msra.mxu0 0
        %1343 = vmatprep.subr.bf16.mxu0 0
        %1344 = vmatpush1.bf16.xpose.msra.mxu0 0
        %1345 = vmatprep.subr.bf16.mxu0 0
        %1346 = vmatpush1.bf16.xpose.msra.mxu0 0
        %1347 = vmatprep.subr.bf16.mxu0 0
        %1348 = vmatpush1.bf16.xpose.msra.mxu0 0
        %1349 = vmatprep.subr.bf16.mxu0 0
        %1350 = vmatpush1.bf16.xpose.msra.mxu0 0
        %1351 = vmatprep.subr.bf16.mxu0 0
        %1352 = vmatpush1.bf16.xpose.msra.mxu0 0
        %1353 = vmatprep.subr.bf16.mxu0 0
        %1354 = vmatpush1.bf16.xpose.msra.mxu0 %v1337
        %1355 = vmatprep.subr.bf16.mxu0 0
        %1356 = vmatpush2.bf16.xpose.msra.mxu0 0
        %1357 = vmatprep.subr.bf16.mxu0 0
        %1358 = vmatpush2.bf16.xpose.msra.mxu0 0
        %1359 = vmatprep.subr.bf16.mxu0 0
        %1360 = vmatpush2.bf16.xpose.msra.mxu0 0
        %1361 = vmatprep.subr.bf16.mxu0 0
        %1362 = vmatpush2.bf16.xpose.msra.mxu0 0
        %1363 = vmatprep.subr.bf16.mxu0 0
        %1364 = vmatpush2.bf16.xpose.msra.mxu0 0
        %1365 = vmatprep.subr.bf16.mxu0 0
        %1366 = vmatpush2.bf16.xpose.msra.mxu0 0
        %1367 = vmatprep.subr.bf16.mxu0 0
        %1368 = vmatpush2.bf16.xpose.msra.mxu0 0
        %1369 = vmatprep.subr.bf16.mxu0 0
        %1370 = vmatpush2.bf16.xpose.msra.mxu0 0
        %1371 = vmatprep.mubr.bf16.mxu0 0
        %1372 = vmatmul.mubr.bf16.gmra.mxu0 %v1334
        %v1373 = vpop.f32.mrf.mxu0
        %v1374 = vadd.f32 0.0, %v1373
        %v1375 = vpop.f32.mrf.mxu0
        %v1376 = vpop.f32.mrf.mxu0
        %v1377 = vadd.f32 0.0, %v1376
        %v1378 = vpop.f32.mrf.mxu0
        %1379 = vdwg.mxu0
        %v1380 = vsel %vm1009, %v1374, -1e+30
        %v1381 = vsel %vm1009, %v1377, -1e+30
        %v1382 = vsel %vm1012, %v1380, -inf
        %1383 = vmax.xlane.f32.xlu0 %v1382
        %v1384 = vpop.xlane.xlu0 %1383
        %v1385 = vsel %vm1012, %v1381, -inf
        %1386 = vmax.xlane.f32.xlu0 %v1385
        %v1387 = vpop.xlane.xlu0 %1386
        %v1388 = vsub.f32 %v1380, %v1384
        %v1389 = vsub.f32 %v1381, %v1387
        %v1390 = vmul.f32 %v1388, 1.442695
        %v1391 = vpow.pop %v1390
        %v1392 = vmul.f32 %v1389, 1.442695
        %v1393 = vpow.pop %v1392
        %v1394 = vsel %vm1012, %v1391, 0.0
        %1395 = vadd.xlane.f32.xlu0 %v1394
        %v1396 = vpop.xlane.xlu0 %1395
        %v1397 = vsel %vm1012, %v1393, 0.0
        %1398 = vadd.xlane.f32.xlu0 %v1397
        %v1399 = vpop.xlane.xlu0 %1398
        %v1400 = vrcp.pop %v1396
        %v1401 = vrcp.pop %v1399
        %v1402 = vmul.f32 %v1391, %v1400
        %v1403 = vmul.f32 %v1393, %v1401
        %v1404 = vpack.c.bf16 %v1403, %v1402
        %1405 = vrot.lane.b32.xlu0 %v956, 40
        %v1406 = vpop.permute.xlu0 %1405
        %v1409 = vsel %vm1012, %v1404, 0
        %1411 = vmatprep.subr.bf16.mxu0 0
        %1412 = vmatpush1.bf16.msra.mxu0 0
        %1413 = vmatprep.subr.bf16.mxu0 0
        %1414 = vmatpush1.bf16.msra.mxu0 0
        %1415 = vmatprep.subr.bf16.mxu0 0
        %1416 = vmatpush1.bf16.msra.mxu0 0
        %1417 = vmatprep.subr.bf16.mxu0 0
        %1418 = vmatpush1.bf16.msra.mxu0 0
        %1419 = vmatprep.subr.bf16.mxu0 0
        %1420 = vmatpush1.bf16.msra.mxu0 0
        %1421 = vmatprep.subr.bf16.mxu0 0
        %1422 = vmatpush1.bf16.msra.mxu0 0
        %1423 = vmatprep.subr.bf16.mxu0 0
        %1424 = vmatpush1.bf16.msra.mxu0 0
        %1425 = vmatprep.subr.bf16.mxu0 0
        %1426 = vmatpush1.bf16.msra.mxu0 %v1406
        %1427 = vmatprep.subr.bf16.mxu0 0
        %1428 = vmatpush2.bf16.msra.mxu0 0
        %1429 = vmatprep.subr.bf16.mxu0 0
        %1430 = vmatpush2.bf16.msra.mxu0 0
        %1431 = vmatprep.subr.bf16.mxu0 0
        %1432 = vmatpush2.bf16.msra.mxu0 0
        %1433 = vmatprep.subr.bf16.mxu0 0
        %1434 = vmatpush2.bf16.msra.mxu0 0
        %1435 = vmatprep.subr.bf16.mxu0 0
        %1436 = vmatpush2.bf16.msra.mxu0 0
        %1437 = vmatprep.subr.bf16.mxu0 0
        %1438 = vmatpush2.bf16.msra.mxu0 0
        %1439 = vmatprep.subr.bf16.mxu0 0
        %1440 = vmatpush2.bf16.msra.mxu0 0
        %1441 = vmatprep.subr.bf16.mxu0 0
        %1442 = vmatpush2.bf16.msra.mxu0 0
        %1443 = vmatprep.mubr.bf16.mxu0 0
        %1444 = vmatmul.mubr.bf16.gmra.mxu0 %v1409
        %v1445 = vpop.f32.mrf.mxu0
        %v1446 = vadd.f32 0.0, %v1445
        %v1447 = vpop.f32.mrf.mxu0
        %v1448 = vpop.f32.mrf.mxu0
        %v1449 = vadd.f32 0.0, %v1448
        %v1450 = vpop.f32.mrf.mxu0
        %1451 = vdwg.mxu0
        %1454 = vrot.lane.b32.xlu0 %v1200, 8
        %v1455 = vpop.permute.xlu0 %1454
        %1456 = vrot.lane.b32.xlu0 %v1203, 8
        %v1457 = vpop.permute.xlu0 %1456
        %1462 = vrot.lane.b32.xlu0 %v1323, 16
        %v1463 = vpop.permute.xlu0 %1462
        %1464 = vrot.lane.b32.xlu0 %v1326, 16
        %v1465 = vpop.permute.xlu0 %1464
        %1470 = vrot.lane.b32.xlu0 %v1446, 24
        %v1471 = vpop.permute.xlu0 %1470
        %1472 = vrot.lane.b32.xlu0 %v1449, 24
        %v1473 = vpop.permute.xlu0 %1472
        %v1476 = vsel %vm960, %v1077, %v1455
        %v1477 = vsel %vm960, %v1080, %v1457
        %v1478 = vsel %vm1012, %v1476, %v1463
        %v1479 = vsel %vm1012, %v1477, %v1465
        %vm1480 = vcmask 195584
        %v1481 = vsel %vm1480, %v1478, %v1471
        %v1482 = vsel %vm1480, %v1479, %v1473
        %v1483 = vpack.c.bf16 %v1482, %v1481
        %v1484 = vld [vmem:[%s3] sm:$0xf]
        %v1485 = vld [vmem:[%s3 + $0x4] sm:$0xf]
        %v1486 = vld [vmem:[%s3 + $0x8] sm:$0xf]
        %v1487 = vld [vmem:[%s3 + $0xc] sm:$0xf]
        %v1488 = vlaneseq
        %v1489 = vshrl.u32 %v1488, 7
        %v1490 = vsub.s32 3, %v1489
        %v1491 = vrot.slane %v331, %v1490
        %v1496 = vunpack.c.l.b16 %v1484
        %v1497 = vunpack.c.l.b16 %v1485
        %v1498 = vunpack.c.l.b16 %v1486
        %v1499 = vunpack.c.l.b16 %v1487
        %v1500 = vpack.c.b16 %v1497, %v1496
        %v1501 = vpack.c.b16 %v1499, %v1498
        %v1505 = vsel %vm911, %v1483, 0
        %1507 = vmatprep.subr.bf16.mxu0 0
        %1508 = vmatpush1.bf16.msra.mxu0 0
        %1509 = vmatprep.subr.bf16.mxu0 0
        %1510 = vmatpush1.bf16.msra.mxu0 0
        %1511 = vmatprep.subr.bf16.mxu0 0
        %1512 = vmatpush1.bf16.msra.mxu0 0
        %1513 = vmatprep.subr.bf16.mxu0 0
        %1514 = vmatpush1.bf16.msra.mxu0 0
        %1515 = vmatprep.subr.bf16.mxu0 0
        %1516 = vmatpush1.bf16.msra.mxu0 0
        %1517 = vmatprep.subr.bf16.mxu0 0
        %1518 = vmatpush1.bf16.msra.mxu0 0
        %1519 = vmatprep.subr.bf16.mxu0 0
        %1520 = vmatpush1.bf16.msra.mxu0 %v1501
        %1521 = vmatprep.subr.bf16.mxu0 0
        %1522 = vmatpush1.bf16.msra.mxu0 %v1500
        %1523 = vmatprep.subr.bf16.mxu0 0
        %1524 = vmatpush2.bf16.msra.mxu0 0
        %1525 = vmatprep.subr.bf16.mxu0 0
        %1526 = vmatpush2.bf16.msra.mxu0 0
        %1527 = vmatprep.subr.bf16.mxu0 0
        %1528 = vmatpush2.bf16.msra.mxu0 0
        %1529 = vmatprep.subr.bf16.mxu0 0
        %1530 = vmatpush2.bf16.msra.mxu0 0
        %1531 = vmatprep.subr.bf16.mxu0 0
        %1532 = vmatpush2.bf16.msra.mxu0 0
        %1533 = vmatprep.subr.bf16.mxu0 0
        %1534 = vmatpush2.bf16.msra.mxu0 0
        %1535 = vmatprep.subr.bf16.mxu0 0
        %1536 = vmatpush2.bf16.msra.mxu0 0
        %1537 = vmatprep.subr.bf16.mxu0 0
        %1538 = vmatpush2.bf16.msra.mxu0 0
        %1539 = vmatprep.mubr.bf16.mxu0 0
        %1540 = vmatmul.mubr.bf16.gmra.mxu0 %v1505
        %v1541 = vpop.f32.mrf.mxu0
        %v1542 = vadd.f32 %v1491, %v1541
        %v1543 = vpop.f32.mrf.mxu0
        %v1544 = vpop.f32.mrf.mxu0
        %v1545 = vadd.f32 %v1491, %v1544
        %v1546 = vpop.f32.mrf.mxu0
        %1547 = vdwg.mxu0
        %v1548 = vpack.c.bf16 %v1545, %v1542
        %v1549 = vld [vmem:[%s5] sm:$0xf]
        %v1550 = vld [vmem:[%s5 + $0x4] sm:$0xf]
        %v1551 = vld [vmem:[%s5 + $0x8] sm:$0xf]
        %v1552 = vld [vmem:[%s5 + $0xc] sm:$0xf]
        %v1553 = vlaneseq
        %v1554 = vshrl.u32 %v1553, 7
        %v1555 = vsub.s32 5, %v1554
        %v1556 = vrot.slane %v331, %v1555
        %v1561 = vunpack.c.l.b16 %v1549
        %v1562 = vunpack.c.l.b16 %v1550
        %v1563 = vunpack.c.l.b16 %v1551
        %v1564 = vunpack.c.l.b16 %v1552
        %v1565 = vpack.c.b16 %v1562, %v1561
        %v1566 = vpack.c.b16 %v1564, %v1563
        %v1570 = vsel %vm911, %v1548, 0
        %1572 = vmatprep.subr.bf16.mxu0 0
        %1573 = vmatpush1.bf16.msra.mxu0 0
        %1574 = vmatprep.subr.bf16.mxu0 0
        %1575 = vmatpush1.bf16.msra.mxu0 0
        %1576 = vmatprep.subr.bf16.mxu0 0
        %1577 = vmatpush1.bf16.msra.mxu0 0
        %1578 = vmatprep.subr.bf16.mxu0 0
        %1579 = vmatpush1.bf16.msra.mxu0 0
        %1580 = vmatprep.subr.bf16.mxu0 0
        %1581 = vmatpush1.bf16.msra.mxu0 0
        %1582 = vmatprep.subr.bf16.mxu0 0
        %1583 = vmatpush1.bf16.msra.mxu0 0
        %1584 = vmatprep.subr.bf16.mxu0 0
        %1585 = vmatpush1.bf16.msra.mxu0 %v1566
        %1586 = vmatprep.subr.bf16.mxu0 0
        %1587 = vmatpush1.bf16.msra.mxu0 %v1565
        %1588 = vmatprep.subr.bf16.mxu0 0
        %1589 = vmatpush2.bf16.msra.mxu0 0
        %1590 = vmatprep.subr.bf16.mxu0 0
        %1591 = vmatpush2.bf16.msra.mxu0 0
        %1592 = vmatprep.subr.bf16.mxu0 0
        %1593 = vmatpush2.bf16.msra.mxu0 0
        %1594 = vmatprep.subr.bf16.mxu0 0
        %1595 = vmatpush2.bf16.msra.mxu0 0
        %1596 = vmatprep.subr.bf16.mxu0 0
        %1597 = vmatpush2.bf16.msra.mxu0 0
        %1598 = vmatprep.subr.bf16.mxu0 0
        %1599 = vmatpush2.bf16.msra.mxu0 0
        %1600 = vmatprep.subr.bf16.mxu0 0
        %1601 = vmatpush2.bf16.msra.mxu0 0
        %1602 = vmatprep.subr.bf16.mxu0 0
        %1603 = vmatpush2.bf16.msra.mxu0 0
        %1604 = vmatprep.mubr.bf16.mxu0 0
        %1605 = vmatmul.mubr.bf16.gmra.mxu0 %v1570
        %v1606 = vpop.f32.mrf.mxu0
        %v1607 = vadd.f32 %v1556, %v1606
        %v1608 = vpop.f32.mrf.mxu0
        %v1609 = vpop.f32.mrf.mxu0
        %v1610 = vadd.f32 %v1556, %v1609
        %v1611 = vpop.f32.mrf.mxu0
        %1612 = vdwg.mxu0
        %v1613 = vpack.c.bf16 %v1545, %v1545
        %v1614 = vld [vmem:[%s4] sm:$0xf]
        %v1615 = vld [vmem:[%s4 + $0x4] sm:$0xf]
        %v1616 = vld [vmem:[%s4 + $0x8] sm:$0xf]
        %v1617 = vld [vmem:[%s4 + $0xc] sm:$0xf]
        %v1622 = vunpack.c.l.b16 %v1614
        %v1623 = vunpack.c.l.b16 %v1615
        %v1624 = vunpack.c.l.b16 %v1616
        %v1625 = vunpack.c.l.b16 %v1617
        %v1626 = vpack.c.b16 %v1623, %v1622
        %v1627 = vpack.c.b16 %v1625, %v1624
        %v1631 = vrot.slane %v331, 4
        %v1634 = vsel %vm911, %v1613, 0
        %1636 = vmatprep.subr.bf16.mxu0 0
        %1637 = vmatpush1.bf16.msra.mxu0 0
        %1638 = vmatprep.subr.bf16.mxu0 0
        %1639 = vmatpush1.bf16.msra.mxu0 0
        %1640 = vmatprep.subr.bf16.mxu0 0
        %1641 = vmatpush1.bf16.msra.mxu0 0
        %1642 = vmatprep.subr.bf16.mxu0 0
        %1643 = vmatpush1.bf16.msra.mxu0 0
        %1644 = vmatprep.subr.bf16.mxu0 0
        %1645 = vmatpush1.bf16.msra.mxu0 0
        %1646 = vmatprep.subr.bf16.mxu0 0
        %1647 = vmatpush1.bf16.msra.mxu0 0
        %1648 = vmatprep.subr.bf16.mxu0 0
        %1649 = vmatpush1.bf16.msra.mxu0 %v1627
        %1650 = vmatprep.subr.bf16.mxu0 0
        %1651 = vmatpush1.bf16.msra.mxu0 %v1626
        %1652 = vmatprep.subr.bf16.mxu0 0
        %1653 = vmatpush2.bf16.msra.mxu0 0
        %1654 = vmatprep.subr.bf16.mxu0 0
        %1655 = vmatpush2.bf16.msra.mxu0 0
        %1656 = vmatprep.subr.bf16.mxu0 0
        %1657 = vmatpush2.bf16.msra.mxu0 0
        %1658 = vmatprep.subr.bf16.mxu0 0
        %1659 = vmatpush2.bf16.msra.mxu0 0
        %1660 = vmatprep.subr.bf16.mxu0 0
        %1661 = vmatpush2.bf16.msra.mxu0 0
        %1662 = vmatprep.subr.bf16.mxu0 0
        %1663 = vmatpush2.bf16.msra.mxu0 0
        %1664 = vmatprep.subr.bf16.mxu0 0
        %1665 = vmatpush2.bf16.msra.mxu0 0
        %1666 = vmatprep.subr.bf16.mxu0 0
        %1667 = vmatpush2.bf16.msra.mxu0 0
        %1668 = vmatprep.mubr.bf16.mxu0 0
        %1669 = vmatmul.mubr.bf16.gmra.mxu0 %v1634
        %v1670 = vpop.f32.mrf.mxu0
        %v1671 = vadd.f32 %v1631, %v1670
        %v1672 = vpop.f32.mrf.mxu0
        %v1673 = vpop.f32.mrf.mxu0
        %v1674 = vpop.f32.mrf.mxu0
        %1675 = vdwg.mxu0
        %v1676 = vpack.c.bf16 %v1671, %v1671
        %v1677 = vpack.c.bf16 %v1610, %v1607
        %v1679 = vsel %vm960, %v1676, 0
        %v1682 = vsel %vm960, %v1677, 0
        %1684 = vmatprep.subr.bf16.mxu0 0
        %1685 = vmatpush1.bf16.xpose.msra.mxu0 0
        %1686 = vmatprep.subr.bf16.mxu0 0
        %1687 = vmatpush1.bf16.xpose.msra.mxu0 0
        %1688 = vmatprep.subr.bf16.mxu0 0
        %1689 = vmatpush1.bf16.xpose.msra.mxu0 0
        %1690 = vmatprep.subr.bf16.mxu0 0
        %1691 = vmatpush1.bf16.xpose.msra.mxu0 0
        %1692 = vmatprep.subr.bf16.mxu0 0
        %1693 = vmatpush1.bf16.xpose.msra.mxu0 0
        %1694 = vmatprep.subr.bf16.mxu0 0
        %1695 = vmatpush1.bf16.xpose.msra.mxu0 0
        %1696 = vmatprep.subr.bf16.mxu0 0
        %1697 = vmatpush1.bf16.xpose.msra.mxu0 0
        %1698 = vmatprep.subr.bf16.mxu0 0
        %1699 = vmatpush1.bf16.xpose.msra.mxu0 %v1682
        %1700 = vmatprep.subr.bf16.mxu0 0
        %1701 = vmatpush2.bf16.xpose.msra.mxu0 0
        %1702 = vmatprep.subr.bf16.mxu0 0
        %1703 = vmatpush2.bf16.xpose.msra.mxu0 0
        %1704 = vmatprep.subr.bf16.mxu0 0
        %1705 = vmatpush2.bf16.xpose.msra.mxu0 0
        %1706 = vmatprep.subr.bf16.mxu0 0
        %1707 = vmatpush2.bf16.xpose.msra.mxu0 0
        %1708 = vmatprep.subr.bf16.mxu0 0
        %1709 = vmatpush2.bf16.xpose.msra.mxu0 0
        %1710 = vmatprep.subr.bf16.mxu0 0
        %1711 = vmatpush2.bf16.xpose.msra.mxu0 0
        %1712 = vmatprep.subr.bf16.mxu0 0
        %1713 = vmatpush2.bf16.xpose.msra.mxu0 0
        %1714 = vmatprep.subr.bf16.mxu0 0
        %1715 = vmatpush2.bf16.xpose.msra.mxu0 0
        %1716 = vmatprep.mubr.bf16.mxu0 0
        %1717 = vmatmul.mubr.bf16.gmra.mxu0 %v1679
        %v1718 = vpop.f32.mrf.mxu0
        %v1719 = vadd.f32 0.0, %v1718
        %v1720 = vpop.f32.mrf.mxu0
        %v1721 = vpop.f32.mrf.mxu0
        %v1722 = vpop.f32.mrf.mxu0
        %1723 = vdwg.mxu0
        %v1724 = vsel %vm885, %v1719, -1e+30
        %vm1725 = vcmask 122880
        %v1726 = vsel %vm1725, %v1724, -inf
        %1727 = vmax.xlane.f32.xlu0 %v1726
        %v1728 = vpop.xlane.xlu0 %1727
        %v1729 = vsub.f32 %v1724, %v1728
        %v1730 = vmul.f32 %v1729, 1.442695
        %v1731 = vpow.pop %v1730
        %v1732 = vsel %vm1725, %v1731, 0.0
        %1733 = vadd.xlane.f32.xlu0 %v1732
        %v1734 = vpop.xlane.xlu0 %1733
        %v1735 = vrcp.pop %v1734
        %v1736 = vmul.f32 %v1731, %v1735
        %v1737 = vpack.c.bf16 %v1736, %v1736
        %1739 = vrot.lane.b32.xlu0 %v1677, 96
        %v1740 = vpop.permute.xlu0 %1739
        %v1743 = vsel %vm1012, %v1737, 0
        %1745 = vmatprep.subr.bf16.mxu0 0
        %1746 = vmatpush1.bf16.msra.mxu0 0
        %1747 = vmatprep.subr.bf16.mxu0 0
        %1748 = vmatpush1.bf16.msra.mxu0 0
        %1749 = vmatprep.subr.bf16.mxu0 0
        %1750 = vmatpush1.bf16.msra.mxu0 0
        %1751 = vmatprep.subr.bf16.mxu0 0
        %1752 = vmatpush1.bf16.msra.mxu0 0
        %1753 = vmatprep.subr.bf16.mxu0 0
        %1754 = vmatpush1.bf16.msra.mxu0 0
        %1755 = vmatprep.subr.bf16.mxu0 0
        %1756 = vmatpush1.bf16.msra.mxu0 0
        %1757 = vmatprep.subr.bf16.mxu0 0
        %1758 = vmatpush1.bf16.msra.mxu0 0
        %1759 = vmatprep.subr.bf16.mxu0 0
        %1760 = vmatpush1.bf16.msra.mxu0 %v1740
        %1761 = vmatprep.subr.bf16.mxu0 0
        %1762 = vmatpush2.bf16.msra.mxu0 0
        %1763 = vmatprep.subr.bf16.mxu0 0
        %1764 = vmatpush2.bf16.msra.mxu0 0
        %1765 = vmatprep.subr.bf16.mxu0 0
        %1766 = vmatpush2.bf16.msra.mxu0 0
        %1767 = vmatprep.subr.bf16.mxu0 0
        %1768 = vmatpush2.bf16.msra.mxu0 0
        %1769 = vmatprep.subr.bf16.mxu0 0
        %1770 = vmatpush2.bf16.msra.mxu0 0
        %1771 = vmatprep.subr.bf16.mxu0 0
        %1772 = vmatpush2.bf16.msra.mxu0 0
        %1773 = vmatprep.subr.bf16.mxu0 0
        %1774 = vmatpush2.bf16.msra.mxu0 0
        %1775 = vmatprep.subr.bf16.mxu0 0
        %1776 = vmatpush2.bf16.msra.mxu0 0
        %1777 = vmatprep.mubr.bf16.mxu0 0
        %1778 = vmatmul.mubr.bf16.gmra.mxu0 %v1743
        %v1779 = vpop.f32.mrf.mxu0
        %v1780 = vadd.f32 0.0, %v1779
        %v1781 = vpop.f32.mrf.mxu0
        %v1782 = vpop.f32.mrf.mxu0
        %v1783 = vpop.f32.mrf.mxu0
        %1784 = vdwg.mxu0
        %1786 = vrot.lane.b32.xlu0 %v1676, 120
        %v1787 = vpop.permute.xlu0 %1786
        %1788 = vrot.lane.b32.xlu0 %v1677, 120
        %v1789 = vpop.permute.xlu0 %1788
        %v1791 = vsel %vm960, %v1787, 0
        %v1794 = vsel %vm960, %v1789, 0
        %1796 = vmatprep.subr.bf16.mxu0 0
        %1797 = vmatpush1.bf16.xpose.msra.mxu0 0
        %1798 = vmatprep.subr.bf16.mxu0 0
        %1799 = vmatpush1.bf16.xpose.msra.mxu0 0
        %1800 = vmatprep.subr.bf16.mxu0 0
        %1801 = vmatpush1.bf16.xpose.msra.mxu0 0
        %1802 = vmatprep.subr.bf16.mxu0 0
        %1803 = vmatpush1.bf16.xpose.msra.mxu0 0
        %1804 = vmatprep.subr.bf16.mxu0 0
        %1805 = vmatpush1.bf16.xpose.msra.mxu0 0
        %1806 = vmatprep.subr.bf16.mxu0 0
        %1807 = vmatpush1.bf16.xpose.msra.mxu0 0
        %1808 = vmatprep.subr.bf16.mxu0 0
        %1809 = vmatpush1.bf16.xpose.msra.mxu0 0
        %1810 = vmatprep.subr.bf16.mxu0 0
        %1811 = vmatpush1.bf16.xpose.msra.mxu0 %v1794
        %1812 = vmatprep.subr.bf16.mxu0 0
        %1813 = vmatpush2.bf16.xpose.msra.mxu0 0
        %1814 = vmatprep.subr.bf16.mxu0 0
        %1815 = vmatpush2.bf16.xpose.msra.mxu0 0
        %1816 = vmatprep.subr.bf16.mxu0 0
        %1817 = vmatpush2.bf16.xpose.msra.mxu0 0
        %1818 = vmatprep.subr.bf16.mxu0 0
        %1819 = vmatpush2.bf16.xpose.msra.mxu0 0
        %1820 = vmatprep.subr.bf16.mxu0 0
        %1821 = vmatpush2.bf16.xpose.msra.mxu0 0
        %1822 = vmatprep.subr.bf16.mxu0 0
        %1823 = vmatpush2.bf16.xpose.msra.mxu0 0
        %1824 = vmatprep.subr.bf16.mxu0 0
        %1825 = vmatpush2.bf16.xpose.msra.mxu0 0
        %1826 = vmatprep.subr.bf16.mxu0 0
        %1827 = vmatpush2.bf16.xpose.msra.mxu0 0
        %1828 = vmatprep.mubr.bf16.mxu0 0
        %1829 = vmatmul.mubr.bf16.gmra.mxu0 %v1791
        %v1830 = vpop.f32.mrf.mxu0
        %v1831 = vadd.f32 0.0, %v1830
        %v1832 = vpop.f32.mrf.mxu0
        %v1833 = vpop.f32.mrf.mxu0
        %v1834 = vpop.f32.mrf.mxu0
        %1835 = vdwg.mxu0
        %v1836 = vsel %vm885, %v1831, -1e+30
        %v1837 = vsel %vm1725, %v1836, -inf
        %1838 = vmax.xlane.f32.xlu0 %v1837
        %v1839 = vpop.xlane.xlu0 %1838
        %v1840 = vsub.f32 %v1836, %v1839
        %v1841 = vmul.f32 %v1840, 1.442695
        %v1842 = vpow.pop %v1841
        %v1843 = vsel %vm1725, %v1842, 0.0
        %1844 = vadd.xlane.f32.xlu0 %v1843
        %v1845 = vpop.xlane.xlu0 %1844
        %v1846 = vrcp.pop %v1845
        %v1847 = vmul.f32 %v1842, %v1846
        %v1848 = vpack.c.bf16 %v1847, %v1847
        %1849 = vrot.lane.b32.xlu0 %v1677, 88
        %v1850 = vpop.permute.xlu0 %1849
        %v1853 = vsel %vm1012, %v1848, 0
        %1855 = vmatprep.subr.bf16.mxu0 0
        %1856 = vmatpush1.bf16.msra.mxu0 0
        %1857 = vmatprep.subr.bf16.mxu0 0
        %1858 = vmatpush1.bf16.msra.mxu0 0
        %1859 = vmatprep.subr.bf16.mxu0 0
        %1860 = vmatpush1.bf16.msra.mxu0 0
        %1861 = vmatprep.subr.bf16.mxu0 0
        %1862 = vmatpush1.bf16.msra.mxu0 0
        %1863 = vmatprep.subr.bf16.mxu0 0
        %1864 = vmatpush1.bf16.msra.mxu0 0
        %1865 = vmatprep.subr.bf16.mxu0 0
        %1866 = vmatpush1.bf16.msra.mxu0 0
        %1867 = vmatprep.subr.bf16.mxu0 0
        %1868 = vmatpush1.bf16.msra.mxu0 0
        %1869 = vmatprep.subr.bf16.mxu0 0
        %1870 = vmatpush1.bf16.msra.mxu0 %v1850
        %1871 = vmatprep.subr.bf16.mxu0 0
        %1872 = vmatpush2.bf16.msra.mxu0 0
        %1873 = vmatprep.subr.bf16.mxu0 0
        %1874 = vmatpush2.bf16.msra.mxu0 0
        %1875 = vmatprep.subr.bf16.mxu0 0
        %1876 = vmatpush2.bf16.msra.mxu0 0
        %1877 = vmatprep.subr.bf16.mxu0 0
        %1878 = vmatpush2.bf16.msra.mxu0 0
        %1879 = vmatprep.subr.bf16.mxu0 0
        %1880 = vmatpush2.bf16.msra.mxu0 0
        %1881 = vmatprep.subr.bf16.mxu0 0
        %1882 = vmatpush2.bf16.msra.mxu0 0
        %1883 = vmatprep.subr.bf16.mxu0 0
        %1884 = vmatpush2.bf16.msra.mxu0 0
        %1885 = vmatprep.subr.bf16.mxu0 0
        %1886 = vmatpush2.bf16.msra.mxu0 0
        %1887 = vmatprep.mubr.bf16.mxu0 0
        %1888 = vmatmul.mubr.bf16.gmra.mxu0 %v1853
        %v1889 = vpop.f32.mrf.mxu0
        %v1890 = vadd.f32 0.0, %v1889
        %v1891 = vpop.f32.mrf.mxu0
        %v1892 = vpop.f32.mrf.mxu0
        %v1893 = vpop.f32.mrf.mxu0
        %1894 = vdwg.mxu0
        %1895 = vrot.lane.b32.xlu0 %v1676, 112
        %v1896 = vpop.permute.xlu0 %1895
        %1897 = vrot.lane.b32.xlu0 %v1677, 112
        %v1898 = vpop.permute.xlu0 %1897
        %v1900 = vsel %vm960, %v1896, 0
        %v1903 = vsel %vm960, %v1898, 0
        %1905 = vmatprep.subr.bf16.mxu0 0
        %1906 = vmatpush1.bf16.xpose.msra.mxu0 0
        %1907 = vmatprep.subr.bf16.mxu0 0
        %1908 = vmatpush1.bf16.xpose.msra.mxu0 0
        %1909 = vmatprep.subr.bf16.mxu0 0
        %1910 = vmatpush1.bf16.xpose.msra.mxu0 0
        %1911 = vmatprep.subr.bf16.mxu0 0
        %1912 = vmatpush1.bf16.xpose.msra.mxu0 0
        %1913 = vmatprep.subr.bf16.mxu0 0
        %1914 = vmatpush1.bf16.xpose.msra.mxu0 0
        %1915 = vmatprep.subr.bf16.mxu0 0
        %1916 = vmatpush1.bf16.xpose.msra.mxu0 0
        %1917 = vmatprep.subr.bf16.mxu0 0
        %1918 = vmatpush1.bf16.xpose.msra.mxu0 0
        %1919 = vmatprep.subr.bf16.mxu0 0
        %1920 = vmatpush1.bf16.xpose.msra.mxu0 %v1903
        %1921 = vmatprep.subr.bf16.mxu0 0
        %1922 = vmatpush2.bf16.xpose.msra.mxu0 0
        %1923 = vmatprep.subr.bf16.mxu0 0
        %1924 = vmatpush2.bf16.xpose.msra.mxu0 0
        %1925 = vmatprep.subr.bf16.mxu0 0
        %1926 = vmatpush2.bf16.xpose.msra.mxu0 0
        %1927 = vmatprep.subr.bf16.mxu0 0
        %1928 = vmatpush2.bf16.xpose.msra.mxu0 0
        %1929 = vmatprep.subr.bf16.mxu0 0
        %1930 = vmatpush2.bf16.xpose.msra.mxu0 0
        %1931 = vmatprep.subr.bf16.mxu0 0
        %1932 = vmatpush2.bf16.xpose.msra.mxu0 0
        %1933 = vmatprep.subr.bf16.mxu0 0
        %1934 = vmatpush2.bf16.xpose.msra.mxu0 0
        %1935 = vmatprep.subr.bf16.mxu0 0
        %1936 = vmatpush2.bf16.xpose.msra.mxu0 0
        %1937 = vmatprep.mubr.bf16.mxu0 0
        %1938 = vmatmul.mubr.bf16.gmra.mxu0 %v1900
        %v1939 = vpop.f32.mrf.mxu0
        %v1940 = vadd.f32 0.0, %v1939
        %v1941 = vpop.f32.mrf.mxu0
        %v1942 = vpop.f32.mrf.mxu0
        %v1943 = vpop.f32.mrf.mxu0
        %1944 = vdwg.mxu0
        %v1945 = vsel %vm885, %v1940, -1e+30
        %v1946 = vsel %vm1725, %v1945, -inf
        %1947 = vmax.xlane.f32.xlu0 %v1946
        %v1948 = vpop.xlane.xlu0 %1947
        %v1949 = vsub.f32 %v1945, %v1948
        %v1950 = vmul.f32 %v1949, 1.442695
        %v1951 = vpow.pop %v1950
        %v1952 = vsel %vm1725, %v1951, 0.0
        %1953 = vadd.xlane.f32.xlu0 %v1952
        %v1954 = vpop.xlane.xlu0 %1953
        %v1955 = vrcp.pop %v1954
        %v1956 = vmul.f32 %v1951, %v1955
        %v1957 = vpack.c.bf16 %v1956, %v1956
        %1958 = vrot.lane.b32.xlu0 %v1677, 80
        %v1959 = vpop.permute.xlu0 %1958
        %v1962 = vsel %vm1012, %v1957, 0
        %1964 = vmatprep.subr.bf16.mxu0 0
        %1965 = vmatpush1.bf16.msra.mxu0 0
        %1966 = vmatprep.subr.bf16.mxu0 0
        %1967 = vmatpush1.bf16.msra.mxu0 0
        %1968 = vmatprep.subr.bf16.mxu0 0
        %1969 = vmatpush1.bf16.msra.mxu0 0
        %1970 = vmatprep.subr.bf16.mxu0 0
        %1971 = vmatpush1.bf16.msra.mxu0 0
        %1972 = vmatprep.subr.bf16.mxu0 0
        %1973 = vmatpush1.bf16.msra.mxu0 0
        %1974 = vmatprep.subr.bf16.mxu0 0
        %1975 = vmatpush1.bf16.msra.mxu0 0
        %1976 = vmatprep.subr.bf16.mxu0 0
        %1977 = vmatpush1.bf16.msra.mxu0 0
        %1978 = vmatprep.subr.bf16.mxu0 0
        %1979 = vmatpush1.bf16.msra.mxu0 %v1959
        %1980 = vmatprep.subr.bf16.mxu0 0
        %1981 = vmatpush2.bf16.msra.mxu0 0
        %1982 = vmatprep.subr.bf16.mxu0 0
        %1983 = vmatpush2.bf16.msra.mxu0 0
        %1984 = vmatprep.subr.bf16.mxu0 0
        %1985 = vmatpush2.bf16.msra.mxu0 0
        %1986 = vmatprep.subr.bf16.mxu0 0
        %1987 = vmatpush2.bf16.msra.mxu0 0
        %1988 = vmatprep.subr.bf16.mxu0 0
        %1989 = vmatpush2.bf16.msra.mxu0 0
        %1990 = vmatprep.subr.bf16.mxu0 0
        %1991 = vmatpush2.bf16.msra.mxu0 0
        %1992 = vmatprep.subr.bf16.mxu0 0
        %1993 = vmatpush2.bf16.msra.mxu0 0
        %1994 = vmatprep.subr.bf16.mxu0 0
        %1995 = vmatpush2.bf16.msra.mxu0 0
        %1996 = vmatprep.mubr.bf16.mxu0 0
        %1997 = vmatmul.mubr.bf16.gmra.mxu0 %v1962
        %v1998 = vpop.f32.mrf.mxu0
        %v1999 = vadd.f32 0.0, %v1998
        %v2000 = vpop.f32.mrf.mxu0
        %v2001 = vpop.f32.mrf.mxu0
        %v2002 = vpop.f32.mrf.mxu0
        %2003 = vdwg.mxu0
        %2004 = vrot.lane.b32.xlu0 %v1676, 104
        %v2005 = vpop.permute.xlu0 %2004
        %2006 = vrot.lane.b32.xlu0 %v1677, 104
        %v2007 = vpop.permute.xlu0 %2006
        %v2009 = vsel %vm960, %v2005, 0
        %v2012 = vsel %vm960, %v2007, 0
        %2014 = vmatprep.subr.bf16.mxu0 0
        %2015 = vmatpush1.bf16.xpose.msra.mxu0 0
        %2016 = vmatprep.subr.bf16.mxu0 0
        %2017 = vmatpush1.bf16.xpose.msra.mxu0 0
        %2018 = vmatprep.subr.bf16.mxu0 0
        %2019 = vmatpush1.bf16.xpose.msra.mxu0 0
        %2020 = vmatprep.subr.bf16.mxu0 0
        %2021 = vmatpush1.bf16.xpose.msra.mxu0 0
        %2022 = vmatprep.subr.bf16.mxu0 0
        %2023 = vmatpush1.bf16.xpose.msra.mxu0 0
        %2024 = vmatprep.subr.bf16.mxu0 0
        %2025 = vmatpush1.bf16.xpose.msra.mxu0 0
        %2026 = vmatprep.subr.bf16.mxu0 0
        %2027 = vmatpush1.bf16.xpose.msra.mxu0 0
        %2028 = vmatprep.subr.bf16.mxu0 0
        %2029 = vmatpush1.bf16.xpose.msra.mxu0 %v2012
        %2030 = vmatprep.subr.bf16.mxu0 0
        %2031 = vmatpush2.bf16.xpose.msra.mxu0 0
        %2032 = vmatprep.subr.bf16.mxu0 0
        %2033 = vmatpush2.bf16.xpose.msra.mxu0 0
        %2034 = vmatprep.subr.bf16.mxu0 0
        %2035 = vmatpush2.bf16.xpose.msra.mxu0 0
        %2036 = vmatprep.subr.bf16.mxu0 0
        %2037 = vmatpush2.bf16.xpose.msra.mxu0 0
        %2038 = vmatprep.subr.bf16.mxu0 0
        %2039 = vmatpush2.bf16.xpose.msra.mxu0 0
        %2040 = vmatprep.subr.bf16.mxu0 0
        %2041 = vmatpush2.bf16.xpose.msra.mxu0 0
        %2042 = vmatprep.subr.bf16.mxu0 0
        %2043 = vmatpush2.bf16.xpose.msra.mxu0 0
        %2044 = vmatprep.subr.bf16.mxu0 0
        %2045 = vmatpush2.bf16.xpose.msra.mxu0 0
        %2046 = vmatprep.mubr.bf16.mxu0 0
        %2047 = vmatmul.mubr.bf16.gmra.mxu0 %v2009
        %v2048 = vpop.f32.mrf.mxu0
        %v2049 = vadd.f32 0.0, %v2048
        %v2050 = vpop.f32.mrf.mxu0
        %v2051 = vpop.f32.mrf.mxu0
        %v2052 = vpop.f32.mrf.mxu0
        %2053 = vdwg.mxu0
        %v2054 = vsel %vm885, %v2049, -1e+30
        %v2055 = vsel %vm1725, %v2054, -inf
        %2056 = vmax.xlane.f32.xlu0 %v2055
        %v2057 = vpop.xlane.xlu0 %2056
        %v2058 = vsub.f32 %v2054, %v2057
        %v2059 = vmul.f32 %v2058, 1.442695
        %v2060 = vpow.pop %v2059
        %v2061 = vsel %vm1725, %v2060, 0.0
        %2062 = vadd.xlane.f32.xlu0 %v2061
        %v2063 = vpop.xlane.xlu0 %2062
        %v2064 = vrcp.pop %v2063
        %v2065 = vmul.f32 %v2060, %v2064
        %v2066 = vpack.c.bf16 %v2065, %v2065
        %2067 = vrot.lane.b32.xlu0 %v1677, 72
        %v2068 = vpop.permute.xlu0 %2067
        %v2071 = vsel %vm1012, %v2066, 0
        %2073 = vmatprep.subr.bf16.mxu0 0
        %2074 = vmatpush1.bf16.msra.mxu0 0
        %2075 = vmatprep.subr.bf16.mxu0 0
        %2076 = vmatpush1.bf16.msra.mxu0 0
        %2077 = vmatprep.subr.bf16.mxu0 0
        %2078 = vmatpush1.bf16.msra.mxu0 0
        %2079 = vmatprep.subr.bf16.mxu0 0
        %2080 = vmatpush1.bf16.msra.mxu0 0
        %2081 = vmatprep.subr.bf16.mxu0 0
        %2082 = vmatpush1.bf16.msra.mxu0 0
        %2083 = vmatprep.subr.bf16.mxu0 0
        %2084 = vmatpush1.bf16.msra.mxu0 0
        %2085 = vmatprep.subr.bf16.mxu0 0
        %2086 = vmatpush1.bf16.msra.mxu0 0
        %2087 = vmatprep.subr.bf16.mxu0 0
        %2088 = vmatpush1.bf16.msra.mxu0 %v2068
        %2089 = vmatprep.subr.bf16.mxu0 0
        %2090 = vmatpush2.bf16.msra.mxu0 0
        %2091 = vmatprep.subr.bf16.mxu0 0
        %2092 = vmatpush2.bf16.msra.mxu0 0
        %2093 = vmatprep.subr.bf16.mxu0 0
        %2094 = vmatpush2.bf16.msra.mxu0 0
        %2095 = vmatprep.subr.bf16.mxu0 0
        %2096 = vmatpush2.bf16.msra.mxu0 0
        %2097 = vmatprep.subr.bf16.mxu0 0
        %2098 = vmatpush2.bf16.msra.mxu0 0
        %2099 = vmatprep.subr.bf16.mxu0 0
        %2100 = vmatpush2.bf16.msra.mxu0 0
        %2101 = vmatprep.subr.bf16.mxu0 0
        %2102 = vmatpush2.bf16.msra.mxu0 0
        %2103 = vmatprep.subr.bf16.mxu0 0
        %2104 = vmatpush2.bf16.msra.mxu0 0
        %2105 = vmatprep.mubr.bf16.mxu0 0
        %2106 = vmatmul.mubr.bf16.gmra.mxu0 %v2071
        %v2107 = vpop.f32.mrf.mxu0
        %v2108 = vadd.f32 0.0, %v2107
        %v2109 = vpop.f32.mrf.mxu0
        %v2110 = vpop.f32.mrf.mxu0
        %v2111 = vpop.f32.mrf.mxu0
        %2112 = vdwg.mxu0
        %2114 = vrot.lane.b32.xlu0 %v1890, 8
        %v2115 = vpop.permute.xlu0 %2114
        %2118 = vrot.lane.b32.xlu0 %v1999, 16
        %v2119 = vpop.permute.xlu0 %2118
        %2122 = vrot.lane.b32.xlu0 %v2108, 24
        %v2123 = vpop.permute.xlu0 %2122
        %v2125 = vsel %vm960, %v1780, %v2115
        %v2126 = vsel %vm1012, %v2125, %v2119
        %v2127 = vsel %vm1480, %v2126, %v2123
        %v2128 = vpack.c.bf16 %v2127, %v2127
        %v2129 = vld [vmem:[%s6] sm:$0xf]
        %v2130 = vld [vmem:[%s6 + $0x4] sm:$0xf]
        %v2131 = vld [vmem:[%s6 + $0x8] sm:$0xf]
        %v2132 = vld [vmem:[%s6 + $0xc] sm:$0xf]
        %v2137 = vunpack.c.l.b16 %v2129
        %v2138 = vunpack.c.l.b16 %v2130
        %v2139 = vunpack.c.l.b16 %v2131
        %v2140 = vunpack.c.l.b16 %v2132
        %v2141 = vpack.c.b16 %v2138, %v2137
        %v2142 = vpack.c.b16 %v2140, %v2139
        %v2145 = vrot.slane %v331, 6
        %v2148 = vsel %vm911, %v2128, 0
        %2150 = vmatprep.subr.bf16.mxu0 0
        %2151 = vmatpush1.bf16.msra.mxu0 0
        %2152 = vmatprep.subr.bf16.mxu0 0
        %2153 = vmatpush1.bf16.msra.mxu0 0
        %2154 = vmatprep.subr.bf16.mxu0 0
        %2155 = vmatpush1.bf16.msra.mxu0 0
        %2156 = vmatprep.subr.bf16.mxu0 0
        %2157 = vmatpush1.bf16.msra.mxu0 0
        %2158 = vmatprep.subr.bf16.mxu0 0
        %2159 = vmatpush1.bf16.msra.mxu0 0
        %2160 = vmatprep.subr.bf16.mxu0 0
        %2161 = vmatpush1.bf16.msra.mxu0 0
        %2162 = vmatprep.subr.bf16.mxu0 0
        %2163 = vmatpush1.bf16.msra.mxu0 %v2142
        %2164 = vmatprep.subr.bf16.mxu0 0
        %2165 = vmatpush1.bf16.msra.mxu0 %v2141
        %2166 = vmatprep.subr.bf16.mxu0 0
        %2167 = vmatpush2.bf16.msra.mxu0 0
        %2168 = vmatprep.subr.bf16.mxu0 0
        %2169 = vmatpush2.bf16.msra.mxu0 0
        %2170 = vmatprep.subr.bf16.mxu0 0
        %2171 = vmatpush2.bf16.msra.mxu0 0
        %2172 = vmatprep.subr.bf16.mxu0 0
        %2173 = vmatpush2.bf16.msra.mxu0 0
        %2174 = vmatprep.subr.bf16.mxu0 0
        %2175 = vmatpush2.bf16.msra.mxu0 0
        %2176 = vmatprep.subr.bf16.mxu0 0
        %2177 = vmatpush2.bf16.msra.mxu0 0
        %2178 = vmatprep.subr.bf16.mxu0 0
        %2179 = vmatpush2.bf16.msra.mxu0 0
        %2180 = vmatprep.subr.bf16.mxu0 0
        %2181 = vmatpush2.bf16.msra.mxu0 0
        %2182 = vmatprep.mubr.bf16.mxu0 0
        %2183 = vmatmul.mubr.bf16.gmra.mxu0 %v2148
        %v2184 = vpop.f32.mrf.mxu0
        %v2185 = vadd.f32 %v2145, %v2184
        %v2186 = vpop.f32.mrf.mxu0
        %v2187 = vpop.f32.mrf.mxu0
        %v2188 = vpop.f32.mrf.mxu0
        %2189 = vdwg.mxu0
        %vm2190 = vcmask 253952
        %v2191 = vsel %vm2190, %v2185, 0.0
        %2192 = vadd.xlane.f32.xlu0 %v2191
        %v2193 = vpop.xlane.xlu0 %2192
        %v2194 = vrcp.pop 32.0
        %v2195 = vmul.f32 %v2193, %v2194
        %v2196 = vsub.f32 %v2185, %v2195
        %v2197 = vmul.f32 %v2196, %v2196
        %v2198 = vsel %vm2190, %v2197, 0.0
        %2199 = vadd.xlane.f32.xlu0 %v2198
        %v2200 = vpop.xlane.xlu0 %2199
        %v2201 = vmul.f32 %v2200, %v2194
        %v2202 = vadd.f32 %v2201, 1e-05
        %v2203 = vrsqrt.pop %v2202
        %v2204 = vmul.f32 %v2196, %v2203
        %v2205 = vrot.slane %v331, 7
        %v2207 = vmul.f32 %v2204, %v2205
        %v2208 = vadd.f32 %v2207, %v332
        %v2209 = vpack.c.bf16 %v2208, %v2208
        %v2210 = vld [vmem:[%s7] sm:$0xf]
        %v2211 = vld [vmem:[%s7 + $0x4] sm:$0xf]
        %v2212 = vld [vmem:[%s7 + $0x8] sm:$0xf]
        %v2213 = vld [vmem:[%s7 + $0xc] sm:$0xf]
        %v2218 = vunpack.c.l.b16 %v2210
        %v2219 = vunpack.c.l.b16 %v2211
        %v2220 = vunpack.c.l.b16 %v2212
        %v2221 = vunpack.c.l.b16 %v2213
        %v2222 = vpack.c.b16 %v2219, %v2218
        %v2223 = vpack.c.b16 %v2221, %v2220
        %v2227 = vrot.slane %v332, 1
        %v2230 = vsel %vm911, %v2209, 0
        %2232 = vmatprep.subr.bf16.mxu0 0
        %2233 = vmatpush1.bf16.msra.mxu0 0
        %2234 = vmatprep.subr.bf16.mxu0 0
        %2235 = vmatpush1.bf16.msra.mxu0 0
        %2236 = vmatprep.subr.bf16.mxu0 0
        %2237 = vmatpush1.bf16.msra.mxu0 0
        %2238 = vmatprep.subr.bf16.mxu0 0
        %2239 = vmatpush1.bf16.msra.mxu0 0
        %2240 = vmatprep.subr.bf16.mxu0 0
        %2241 = vmatpush1.bf16.msra.mxu0 0
        %2242 = vmatprep.subr.bf16.mxu0 0
        %2243 = vmatpush1.bf16.msra.mxu0 0
        %2244 = vmatprep.subr.bf16.mxu0 0
        %2245 = vmatpush1.bf16.msra.mxu0 %v2223
        %2246 = vmatprep.subr.bf16.mxu0 0
        %2247 = vmatpush1.bf16.msra.mxu0 %v2222
        %2248 = vmatprep.subr.bf16.mxu0 0
        %2249 = vmatpush2.bf16.msra.mxu0 0
        %2250 = vmatprep.subr.bf16.mxu0 0
        %2251 = vmatpush2.bf16.msra.mxu0 0
        %2252 = vmatprep.subr.bf16.mxu0 0
        %2253 = vmatpush2.bf16.msra.mxu0 0
        %2254 = vmatprep.subr.bf16.mxu0 0
        %2255 = vmatpush2.bf16.msra.mxu0 0
        %2256 = vmatprep.subr.bf16.mxu0 0
        %2257 = vmatpush2.bf16.msra.mxu0 0
        %2258 = vmatprep.subr.bf16.mxu0 0
        %2259 = vmatpush2.bf16.msra.mxu0 0
        %2260 = vmatprep.subr.bf16.mxu0 0
        %2261 = vmatpush2.bf16.msra.mxu0 0
        %2262 = vmatprep.subr.bf16.mxu0 0
        %2263 = vmatpush2.bf16.msra.mxu0 0
        %2264 = vmatprep.mubr.bf16.mxu0 0
        %2265 = vmatmul.mubr.bf16.gmra.mxu0 %v2230
        %v2266 = vpop.f32.mrf.mxu0
        %v2267 = vadd.f32 %v2227, %v2266
        %v2268 = vpop.f32.mrf.mxu0
        %v2269 = vpop.f32.mrf.mxu0
        %v2270 = vpop.f32.mrf.mxu0
        %2271 = vdwg.mxu0
        %2272 = vst [vmem:[%s324] sm:$0x1] %v2267
        %s2273 = sand.u32 %s225, 1
        %s2274 = scalar_lea.sflag [#allocation4], %s2273
        %s2275 = sand.u32 %s225, 1
        %s2276 = scalar_lea.vmem [#allocation3], %s2275
        // Predicated region
        $region57: #{tpu_custom_call.1} parent=55 // pred_check
          %p2277 = pneg %p235
        $region58: #{tpu_custom_call.1} parent=55 // pred_check_branch
          %2279 = sbr.rel (%p2277) target = $region60
        $region59: #{tpu_custom_call.1} parent=55 // pred_region
          %s2281 = ssub.s32 16, 16
          %2282 = vsyncadd %s2274, %s2281
          %s2283 = smul.addr %s23, 16
          %s2284 = scalar_lea.hbm %s9, %s2283
          %s2286 = sshll.u32 %s2276, 4
          %s2287 = int_to_ptr.vmem [resolvable:$true] %s2286
          %2289 = dma.vmem_to_hbm [thread:$0]  %s2287, 16, %s2284, %s2274
        $region60: #{tpu_custom_call.1} parent=55 // pred_fallthru
          _
      $region56: #{tpu_custom_call.1} parent=5 // pred_fallthru
        _
      %p2290 = scmp.le.s32.totalorder 2, %s18
      // Predicated region
      $region61: #{tpu_custom_call.1} parent=5 // pred_check
        %p2291 = pneg %p2290
      $region62: #{tpu_custom_call.1} parent=5 // pred_check_branch
        %2293 = sbr.rel (%p2291) target = $region64
      $region63: #{tpu_custom_call.1} parent=5 // pred_region
        %s2294 = ssub.s32 %s18, 2
        // Predicated region
        $region65: #{tpu_custom_call.1} parent=63 // pred_check
          %p2295 = pneg %p241
        $region66: #{tpu_custom_call.1} parent=63 // pred_check_branch
          %2297 = sbr.rel (%p2295) target = $region68
        $region67: #{tpu_custom_call.1} parent=63 // pred_region
          %s2298 = sand.u32 %s226, 1
          %s2299 = scalar_lea.sflag [#allocation4], %s2298
          %s2300 = sand.u32 %s226, 1
          %s2301 = scalar_lea.vmem [#allocation3], %s2300
          %2302 = dma.done %s2299, 16
        $region68: #{tpu_custom_call.1} parent=63 // pred_fallthru
          _
      $region64: #{tpu_custom_call.1} parent=5 // pred_fallthru
        _
    $region6: #{tpu_custom_call.1} parent=1 // loop_footer
      %s22 = sadd.s32 1, %s18
    $region7: #{tpu_custom_call.1} parent=1 // loop_footer_branch
      %17 = sbr.rel target = $region3
    $region8: #{tpu_custom_call.1} parent=1 // loop_exit
      _
    %2303 = vsyncpa [#allocation4], 1
    %s2304 = scalar_lea.sflag [#allocation4], 1
    %2305 = vsyncpa %s2304, 1

</llo_original>
